<compile_context>
chip_gen: v6e
topology: v6e:2x2x1
jax: 0.10.0
libtpu: 0.0.40
codegen_flags: <defaults>
</compile_context>

<pallas_src>
import numpy as np
import jax
import jax.numpy as jnp
from jax.experimental import pallas as pl
from jax.experimental.pallas import tpu as pltpu


# ----------------------------- Pallas kernel --------------------------------

def _cmm(ar, ai, br, bi):
    """Complex matmul via 3 real matmuls (Gauss trick), f32 MXU accumulate."""
    p1 = jnp.dot(ar, br, preferred_element_type=jnp.float32)
    p2 = jnp.dot(ai, bi, preferred_element_type=jnp.float32)
    p3 = jnp.dot(ar + ai, br + bi, preferred_element_type=jnp.float32)
    return p1 - p2, p3 - p1 - p2


def _dc_kernel(img_re, img_im, x0_re, x0_im,
               sens_re, sens_im, mask_ref,
               ah_re, ah_im, awt_re, awt_im,
               bh_re, bh_im, bwt_re, bwt_im,
               rep_ref, sum_ref, mu_ref,
               out_re, out_im,
               comb_r, comb_i):
    g = pl.program_id(0)

    @pl.when(g == 0)
    def _():
        comb_r[...] = jnp.zeros_like(comb_r)
        comb_i[...] = jnp.zeros_like(comb_i)

    ir = img_re[...]
    ii = img_im[...]

    # Broadcast the (H, W) image across the packed coil-group lane axis via a
    # replication matmul: (H, W) @ (W, G*W) -> (H, G*W).  Stays lane-dense.
    rep = rep_ref[...]
    irp = jnp.dot(ir, rep, preferred_element_type=jnp.float32)
    iip = jnp.dot(ii, rep, preferred_element_type=jnp.float32)

    sr = sens_re[...]
    si = sens_im[...]
    m = mask_ref[...]

    # coil images = sens * img          (packed (H, G*W))
    cr = sr * irp - si * iip
    ci = sr * iip + si * irp

    # kspace = A_H @ coil @ blockdiag(A_W^T)   (shifts + 1/sqrt(HW) folded in)
    t1r, t1i = _cmm(ah_re[...], ah_im[...], cr, ci)
    kr, ki = _cmm(t1r, t1i, awt_re[...], awt_im[...])

    # apply sampling mask
    kr = kr * m
    ki = ki * m

    # image space = B_H @ masked @ blockdiag(B_W^T)  (shifts + sqrt(HW) folded in)
    t2r, t2i = _cmm(bh_re[...], bh_im[...], kr, ki)
    ur, ui = _cmm(t2r, t2i, bwt_re[...], bwt_im[...])

    # conj(sens) * u, then sum this group's coils with a reduction matmul
    pr = sr * ur + si * ui
    pi = sr * ui - si * ur
    comb_r[...] += jnp.dot(pr, sum_ref[...], preferred_element_type=jnp.float32)
    comb_i[...] += jnp.dot(pi, sum_ref[...], preferred_element_type=jnp.float32)

    @pl.when(g == pl.num_programs(0) - 1)
    def _():
        mu = mu_ref[0]
        out_re[...] = ir - mu * (comb_r[...] - x0_re[...])
        out_im[...] = ii - mu * (comb_i[...] - x0_im[...])


# ------------------------------ glue (JAX / NumPy) ---------------------------

def _op_mats(n, inverse):
    """Shifted (i)DFT operator as real/imag float32 matrices."""
    idx = np.arange(n)
    ang = 2.0 * np.pi * np.outer(idx, idx) / n
    eye = np.eye(n)
    if not inverse:
        fr, fi = np.cos(ang), -np.sin(ang)                        # exp(-i ang)
        p_left = np.fft.fftshift(eye, axes=0)
        p_right = np.fft.ifftshift(eye, axes=0)
    else:
        fr, fi = np.cos(ang) / n, np.sin(ang) / n                 # exp(+i ang)/n
        p_left = np.fft.ifftshift(eye, axes=0)
        p_right = np.fft.fftshift(eye, axes=0)
    ar = p_left @ fr @ p_right
    ai = p_left @ fi @ p_right
    return ar.astype(np.float32), ai.astype(np.float32)


@jax.jit
def _dc_call(img, mu_arr, x0, sens_maps, mask):
    B, _, H, W = img.shape
    assert B == 1, "module broadcasting is only shape-consistent for batch == 1"
    C = sens_maps.shape[1]

    # Coil-group size G so the packed lane axis G*W is >= 128 where possible.
    if W >= 128:
        G = 1
    else:
        G = max(1, min(C, 128 // W))
        while C % G != 0:
            G -= 1
    num_groups = C // G
    GW = G * W
    scale = float(np.sqrt(H * W))

    ah_re, ah_im = _op_mats(H, inverse=False)
    aw_re, aw_im = _op_mats(W, inverse=False)
    bh_re, bh_im = _op_mats(H, inverse=True)
    bw_re, bw_im = _op_mats(W, inverse=True)

    ahs_re = (ah_re / scale).astype(np.float32)                   # 1/sqrt(HW) folded in
    ahs_im = (ah_im / scale).astype(np.float32)
    bhs_re = (bh_re * scale).astype(np.float32)                   # sqrt(HW) folded in
    bhs_im = (bh_im * scale).astype(np.float32)

    eye_g = np.eye(G, dtype=np.float32)
    awt_bd_re = np.kron(eye_g, aw_re.T.astype(np.float32))        # blockdiag(A_W^T)
    awt_bd_im = np.kron(eye_g, aw_im.T.astype(np.float32))
    bwt_bd_re = np.kron(eye_g, bw_re.T.astype(np.float32))        # blockdiag(B_W^T)
    bwt_bd_im = np.kron(eye_g, bw_im.T.astype(np.float32))
    rep = np.kron(np.ones((1, G), np.float32), np.eye(W, dtype=np.float32))   # (W, GW)
    summ = np.kron(np.ones((G, 1), np.float32), np.eye(W, dtype=np.float32))  # (GW, W)

    img2 = img.reshape(H, W)
    x02 = x0.reshape(H, W)
    # lane-dense coil packing: (C, H, W) -> (H, C*W), coil-major along lanes
    sens = jnp.transpose(sens_maps.reshape(C, H, W), (1, 0, 2)).reshape(H, C * W)
    msk = jnp.transpose(mask.reshape(C, H, W), (1, 0, 2)).reshape(H, C * W)
    msk = msk.astype(jnp.float32)

    args = (
        jnp.real(img2), jnp.imag(img2),
        jnp.real(x02), jnp.imag(x02),
        jnp.real(sens), jnp.imag(sens),
        msk,
        jnp.asarray(ahs_re), jnp.asarray(ahs_im),
        jnp.asarray(awt_bd_re), jnp.asarray(awt_bd_im),
        jnp.asarray(bhs_re), jnp.asarray(bhs_im),
        jnp.asarray(bwt_bd_re), jnp.asarray(bwt_bd_im),
        jnp.asarray(rep), jnp.asarray(summ),
        mu_arr,
    )

    full_hw = pl.BlockSpec((H, W), lambda g: (0, 0))
    grp = pl.BlockSpec((H, GW), lambda g: (0, g))
    op_h = pl.BlockSpec((H, H), lambda g: (0, 0))
    op_w = pl.BlockSpec((GW, GW), lambda g: (0, 0))
    rep_spec = pl.BlockSpec((W, GW), lambda g: (0, 0))
    sum_spec = pl.BlockSpec((GW, W), lambda g: (0, 0))
    smem = pl.BlockSpec(memory_space=pltpu.MemorySpace.SMEM)

    in_specs = [full_hw, full_hw, full_hw, full_hw,
                grp, grp, grp,
                op_h, op_h, op_w, op_w,
                op_h, op_h, op_w, op_w,
                rep_spec, sum_spec, smem]
    out_specs = (full_hw, full_hw)
    out_shape = (jax.ShapeDtypeStruct((H, W), jnp.float32),
                 jax.ShapeDtypeStruct((H, W), jnp.float32))

    out_re, out_im = pl.pallas_call(
        _dc_kernel,
        out_shape=out_shape,
        grid_spec=pltpu.PrefetchScalarGridSpec(
            num_scalar_prefetch=0,
            grid=(num_groups,),
            in_specs=in_specs,
            out_specs=out_specs,
            scratch_shapes=[pltpu.VMEM((H, W), jnp.float32),
                            pltpu.VMEM((H, W), jnp.float32)],
        ),
        compiler_params=pltpu.CompilerParams(
            dimension_semantics=("arbitrary",),
            vmem_limit_bytes=32 * 1024 * 1024,
        ),
    )(*args)

    next_x = (out_re + 1j * out_im).astype(jnp.complex64)
    return next_x.reshape(B, 1, H, W)


def data_consistency_ssdu_gd(img, mu, x0, sens_maps, mask):
    """next_x = img - mu * [(E^h E) img - x0], E = mask * shifted-FFT2 * sens."""
    mu_arr = jnp.asarray(mu, dtype=jnp.float32).reshape(1)
    return _dc_call(img, mu_arr, x0, sens_maps, mask)


# --------------------------- pure-JAX reference -------------------------------

def _reference(img, mu, x0, sens_maps, mask):
    H, W = mask.shape[-2:]
    scalar = jnp.sqrt(jnp.array(H * W, jnp.float32)).astype(jnp.complex64)
    coil = sens_maps * img
    ksp = jnp.fft.fftshift(
        jnp.fft.fftn(jnp.fft.ifftshift(coil, axes=(-2, -1)), axes=(-2, -1)),
        axes=(-2, -1)) / scalar
    mk = ksp * mask
    isp = jnp.fft.ifftshift(
        jnp.fft.ifftn(jnp.fft.fftshift(mk, axes=(-2, -1)), axes=(-2, -1)),
        axes=(-2, -1)) * scalar
    comb = jnp.sum(isp * jnp.conj(sens_maps), axis=1)
    grad = comb - x0
    return img - mu * grad


# ----------------------------------- main -------------------------------------

if __name__ == "__main__":
    key = jax.random.PRNGKey(0)
    B, C, H, W = 1, 16, 16, 16          # 16 coils -> 2 coil groups of 8 (128 lanes)
    k1, k2, k3, k4, k5, k6, k7 = jax.random.split(key, 7)

    img = (jax.random.normal(k1, (B, 1, H, W))
           + 1j * jax.random.normal(k2, (B, 1, H, W))).astype(jnp.complex64)
    x0 = (jax.random.normal(k3, (B, 1, H, W))
          + 1j * jax.random.normal(k4, (B, 1, H, W))).astype(jnp.complex64)
    sens_maps = (jax.random.normal(k5, (B, C, H, W))
                 + 1j * jax.random.normal(k6, (B, C, H, W))).astype(jnp.complex64)
    mask = (jax.random.uniform(k7, (B, C, H, W)) > 0.5).astype(jnp.float32)
    mu = 0.05

    out = data_consistency_ssdu_gd(img, mu, x0, sens_maps, mask)
    out = jax.block_until_ready(out)

    ref = jax.block_until_ready(_reference(img, mu, x0, sens_maps, mask))
    assert out.shape == (B, 1, H, W) and out.dtype == jnp.complex64
    assert np.allclose(np.asarray(out), np.asarray(ref), atol=1e-2, rtol=1e-2)
    print("KERNEL_OK")
</pallas_src>

<mosaic_0001>
module attributes {stable_mosaic.version = 11 : i64} {
  func.func @_dc_kernel(%arg0: i32, %arg1: memref<16x16xf32, #tpu.memory_space<vmem>>, %arg2: memref<16x16xf32, #tpu.memory_space<vmem>>, %arg3: memref<16x16xf32, #tpu.memory_space<vmem>>, %arg4: memref<16x16xf32, #tpu.memory_space<vmem>>, %arg5: memref<16x128xf32, #tpu.memory_space<vmem>>, %arg6: memref<16x128xf32, #tpu.memory_space<vmem>>, %arg7: memref<16x128xf32, #tpu.memory_space<vmem>>, %arg8: memref<16x16xf32, #tpu.memory_space<vmem>>, %arg9: memref<16x16xf32, #tpu.memory_space<vmem>>, %arg10: memref<128x128xf32, #tpu.memory_space<vmem>>, %arg11: memref<128x128xf32, #tpu.memory_space<vmem>>, %arg12: memref<16x16xf32, #tpu.memory_space<vmem>>, %arg13: memref<16x16xf32, #tpu.memory_space<vmem>>, %arg14: memref<128x128xf32, #tpu.memory_space<vmem>>, %arg15: memref<128x128xf32, #tpu.memory_space<vmem>>, %arg16: memref<16x128xf32, #tpu.memory_space<vmem>>, %arg17: memref<128x16xf32, #tpu.memory_space<vmem>>, %arg18: memref<1xf32, #tpu.memory_space<smem>>, %arg19: memref<16x16xf32, #tpu.memory_space<vmem>>, %arg20: memref<16x16xf32, #tpu.memory_space<vmem>>, %arg21: memref<16x16xf32, #tpu.memory_space<vmem>>, %arg22: memref<16x16xf32, #tpu.memory_space<vmem>>) attributes {dimension_semantics = [#tpu.dimension_semantics<arbitrary>], iteration_bounds = array<i64: 2>, scalar_prefetch = 0 : i64, scratch_operands = 2 : i64, tpu.core_type = #tpu.core_type<tc>, window_params = [{pipeline_mode = #tpu.pipeline_mode<synchronous>, transform_indices = @transform_0, window_bounds = array<i64: 16, 16>}, {pipeline_mode = #tpu.pipeline_mode<synchronous>, transform_indices = @transform_1, window_bounds = array<i64: 16, 16>}, {pipeline_mode = #tpu.pipeline_mode<synchronous>, transform_indices = @transform_2, window_bounds = array<i64: 16, 16>}, {pipeline_mode = #tpu.pipeline_mode<synchronous>, transform_indices = @transform_3, window_bounds = array<i64: 16, 16>}, {transform_indices = @transform_4, window_bounds = array<i64: 16, 128>}, {transform_indices = @transform_5, window_bounds = array<i64: 16, 128>}, {transform_indices = @transform_6, window_bounds = array<i64: 16, 128>}, {pipeline_mode = #tpu.pipeline_mode<synchronous>, transform_indices = @transform_7, window_bounds = array<i64: 16, 16>}, {pipeline_mode = #tpu.pipeline_mode<synchronous>, transform_indices = @transform_8, window_bounds = array<i64: 16, 16>}, {pipeline_mode = #tpu.pipeline_mode<synchronous>, transform_indices = @transform_9, window_bounds = array<i64: 128, 128>}, {pipeline_mode = #tpu.pipeline_mode<synchronous>, transform_indices = @transform_10, window_bounds = array<i64: 128, 128>}, {pipeline_mode = #tpu.pipeline_mode<synchronous>, transform_indices = @transform_11, window_bounds = array<i64: 16, 16>}, {pipeline_mode = #tpu.pipeline_mode<synchronous>, transform_indices = @transform_12, window_bounds = array<i64: 16, 16>}, {pipeline_mode = #tpu.pipeline_mode<synchronous>, transform_indices = @transform_13, window_bounds = array<i64: 128, 128>}, {pipeline_mode = #tpu.pipeline_mode<synchronous>, transform_indices = @transform_14, window_bounds = array<i64: 128, 128>}, {pipeline_mode = #tpu.pipeline_mode<synchronous>, transform_indices = @transform_15, window_bounds = array<i64: 16, 128>}, {pipeline_mode = #tpu.pipeline_mode<synchronous>, transform_indices = @transform_16, window_bounds = array<i64: 128, 16>}, {transform_indices = @transform_17, window_bounds = array<i64: 1>}, {pipeline_mode = #tpu.pipeline_mode<synchronous>, transform_indices = @transform_18, window_bounds = array<i64: 16, 16>}, {pipeline_mode = #tpu.pipeline_mode<synchronous>, transform_indices = @transform_19, window_bounds = array<i64: 16, 16>}]} {
    %c0_i32 = arith.constant 0 : i32
    %0 = arith.cmpi eq, %arg0, %c0_i32 : i32
    %1 = arith.extui %0 : i1 to i32
    %c0_i32_0 = arith.constant 0 : i32
    %2 = arith.cmpi ne, %1, %c0_i32_0 : i32
    scf.if %2 {
      %cst_56 = arith.constant 0.000000e+00 : f32
      %78 = vector.broadcast %cst_56 : f32 to vector<16x16xf32>
      %c0_57 = arith.constant 0 : index
      %c0_58 = arith.constant 0 : index
      %79 = vector.load %arg21[%c0_57, %c0_58] : memref<16x16xf32, #tpu.memory_space<vmem>>, vector<16x16xf32>
      tpu.vector_store %arg21[%c0_57, %c0_58], %78 {strides = array<i32>} : memref<16x16xf32, #tpu.memory_space<vmem>>, vector<16x16xf32>,
      %cst_59 = arith.constant 0.000000e+00 : f32
      %80 = vector.broadcast %cst_59 : f32 to vector<16x16xf32>
      %c0_60 = arith.constant 0 : index
      %c0_61 = arith.constant 0 : index
      %81 = vector.load %arg22[%c0_60, %c0_61] : memref<16x16xf32, #tpu.memory_space<vmem>>, vector<16x16xf32>
      tpu.vector_store %arg22[%c0_60, %c0_61], %80 {strides = array<i32>} : memref<16x16xf32, #tpu.memory_space<vmem>>, vector<16x16xf32>,
    } else {
    }
    %c0 = arith.constant 0 : index
    %c0_1 = arith.constant 0 : index
    %3 = vector.load %arg1[%c0, %c0_1] : memref<16x16xf32, #tpu.memory_space<vmem>>, vector<16x16xf32>
    %c0_2 = arith.constant 0 : index
    %c0_3 = arith.constant 0 : index
    %4 = vector.load %arg2[%c0_2, %c0_3] : memref<16x16xf32, #tpu.memory_space<vmem>>, vector<16x16xf32>
    %c0_4 = arith.constant 0 : index
    %c0_5 = arith.constant 0 : index
    %5 = vector.load %arg16[%c0_4, %c0_5] : memref<16x128xf32, #tpu.memory_space<vmem>>, vector<16x128xf32>
    %cst = arith.constant dense<0.000000e+00> : vector<16x128xf32>
    %6 = tpu.matmul %3, %5, %cst {dimension_numbers = #tpu.dot_dimension_numbers<[1], [0], [0], [1], [0, 0, 1, 1], [], []>} : vector<16x16xf32>, vector<16x128xf32>, vector<16x128xf32> -> vector<16x128xf32>
    %cst_6 = arith.constant dense<0.000000e+00> : vector<16x128xf32>
    %7 = tpu.matmul %4, %5, %cst_6 {dimension_numbers = #tpu.dot_dimension_numbers<[1], [0], [0], [1], [0, 0, 1, 1], [], []>} : vector<16x16xf32>, vector<16x128xf32>, vector<16x128xf32> -> vector<16x128xf32>
    %c0_7 = arith.constant 0 : index
    %c0_8 = arith.constant 0 : index
    %8 = vector.load %arg5[%c0_7, %c0_8] : memref<16x128xf32, #tpu.memory_space<vmem>>, vector<16x128xf32>
    %c0_9 = arith.constant 0 : index
    %c0_10 = arith.constant 0 : index
    %9 = vector.load %arg6[%c0_9, %c0_10] : memref<16x128xf32, #tpu.memory_space<vmem>>, vector<16x128xf32>
    %c0_11 = arith.constant 0 : index
    %c0_12 = arith.constant 0 : index
    %10 = vector.load %arg7[%c0_11, %c0_12] : memref<16x128xf32, #tpu.memory_space<vmem>>, vector<16x128xf32>
    %11 = arith.mulf %8, %6 : vector<16x128xf32>
    %12 = arith.mulf %9, %7 : vector<16x128xf32>
    %13 = arith.subf %11, %12 : vector<16x128xf32>
    %14 = arith.mulf %8, %7 : vector<16x128xf32>
    %15 = arith.mulf %9, %6 : vector<16x128xf32>
    %16 = arith.addf %14, %15 : vector<16x128xf32>
    %c0_13 = arith.constant 0 : index
    %c0_14 = arith.constant 0 : index
    %17 = vector.load %arg8[%c0_13, %c0_14] : memref<16x16xf32, #tpu.memory_space<vmem>>, vector<16x16xf32>
    %c0_15 = arith.constant 0 : index
    %c0_16 = arith.constant 0 : index
    %18 = vector.load %arg9[%c0_15, %c0_16] : memref<16x16xf32, #tpu.memory_space<vmem>>, vector<16x16xf32>
    %cst_17 = arith.constant dense<0.000000e+00> : vector<16x128xf32>
    %19 = tpu.matmul %17, %13, %cst_17 {dimension_numbers = #tpu.dot_dimension_numbers<[1], [0], [0], [1], [0, 0, 1, 1], [], []>} : vector<16x16xf32>, vector<16x128xf32>, vector<16x128xf32> -> vector<16x128xf32>
    %cst_18 = arith.constant dense<0.000000e+00> : vector<16x128xf32>
    %20 = tpu.matmul %18, %16, %cst_18 {dimension_numbers = #tpu.dot_dimension_numbers<[1], [0], [0], [1], [0, 0, 1, 1], [], []>} : vector<16x16xf32>, vector<16x128xf32>, vector<16x128xf32> -> vector<16x128xf32>
    %21 = arith.addf %17, %18 : vector<16x16xf32>
    %22 = arith.addf %13, %16 : vector<16x128xf32>
    %cst_19 = arith.constant dense<0.000000e+00> : vector<16x128xf32>
    %23 = tpu.matmul %21, %22, %cst_19 {dimension_numbers = #tpu.dot_dimension_numbers<[1], [0], [0], [1], [0, 0, 1, 1], [], []>} : vector<16x16xf32>, vector<16x128xf32>, vector<16x128xf32> -> vector<16x128xf32>
    %24 = arith.subf %19, %20 : vector<16x128xf32>
    %25 = arith.subf %23, %19 : vector<16x128xf32>
    %26 = arith.subf %25, %20 : vector<16x128xf32>
    %c0_20 = arith.constant 0 : index
    %c0_21 = arith.constant 0 : index
    %27 = vector.load %arg10[%c0_20, %c0_21] : memref<128x128xf32, #tpu.memory_space<vmem>>, vector<128x128xf32>
    %c0_22 = arith.constant 0 : index
    %c0_23 = arith.constant 0 : index
    %28 = vector.load %arg11[%c0_22, %c0_23] : memref<128x128xf32, #tpu.memory_space<vmem>>, vector<128x128xf32>
    %cst_24 = arith.constant dense<0.000000e+00> : vector<16x128xf32>
    %29 = tpu.matmul %24, %27, %cst_24 {dimension_numbers = #tpu.dot_dimension_numbers<[1], [0], [0], [1], [0, 0, 1, 1], [], []>} : vector<16x128xf32>, vector<128x128xf32>, vector<16x128xf32> -> vector<16x128xf32>
    %cst_25 = arith.constant dense<0.000000e+00> : vector<16x128xf32>
    %30 = tpu.matmul %26, %28, %cst_25 {dimension_numbers = #tpu.dot_dimension_numbers<[1], [0], [0], [1], [0, 0, 1, 1], [], []>} : vector<16x128xf32>, vector<128x128xf32>, vector<16x128xf32> -> vector<16x128xf32>
    %31 = arith.addf %24, %26 : vector<16x128xf32>
    %32 = arith.addf %27, %28 : vector<128x128xf32>
    %cst_26 = arith.constant dense<0.000000e+00> : vector<16x128xf32>
    %33 = tpu.matmul %31, %32, %cst_26 {dimension_numbers = #tpu.dot_dimension_numbers<[1], [0], [0], [1], [0, 0, 1, 1], [], []>} : vector<16x128xf32>, vector<128x128xf32>, vector<16x128xf32> -> vector<16x128xf32>
    %34 = arith.subf %29, %30 : vector<16x128xf32>
    %35 = arith.subf %33, %29 : vector<16x128xf32>
    %36 = arith.subf %35, %30 : vector<16x128xf32>
    %37 = arith.mulf %34, %10 : vector<16x128xf32>
    %38 = arith.mulf %36, %10 : vector<16x128xf32>
    %c0_27 = arith.constant 0 : index
    %c0_28 = arith.constant 0 : index
    %39 = vector.load %arg12[%c0_27, %c0_28] : memref<16x16xf32, #tpu.memory_space<vmem>>, vector<16x16xf32>
    %c0_29 = arith.constant 0 : index
    %c0_30 = arith.constant 0 : index
    %40 = vector.load %arg13[%c0_29, %c0_30] : memref<16x16xf32, #tpu.memory_space<vmem>>, vector<16x16xf32>
    %cst_31 = arith.constant dense<0.000000e+00> : vector<16x128xf32>
    %41 = tpu.matmul %39, %37, %cst_31 {dimension_numbers = #tpu.dot_dimension_numbers<[1], [0], [0], [1], [0, 0, 1, 1], [], []>} : vector<16x16xf32>, vector<16x128xf32>, vector<16x128xf32> -> vector<16x128xf32>
    %cst_32 = arith.constant dense<0.000000e+00> : vector<16x128xf32>
    %42 = tpu.matmul %40, %38, %cst_32 {dimension_numbers = #tpu.dot_dimension_numbers<[1], [0], [0], [1], [0, 0, 1, 1], [], []>} : vector<16x16xf32>, vector<16x128xf32>, vector<16x128xf32> -> vector<16x128xf32>
    %43 = arith.addf %39, %40 : vector<16x16xf32>
    %44 = arith.addf %37, %38 : vector<16x128xf32>
    %cst_33 = arith.constant dense<0.000000e+00> : vector<16x128xf32>
    %45 = tpu.matmul %43, %44, %cst_33 {dimension_numbers = #tpu.dot_dimension_numbers<[1], [0], [0], [1], [0, 0, 1, 1], [], []>} : vector<16x16xf32>, vector<16x128xf32>, vector<16x128xf32> -> vector<16x128xf32>
    %46 = arith.subf %41, %42 : vector<16x128xf32>
    %47 = arith.subf %45, %41 : vector<16x128xf32>
    %48 = arith.subf %47, %42 : vector<16x128xf32>
    %c0_34 = arith.constant 0 : index
    %c0_35 = arith.constant 0 : index
    %49 = vector.load %arg14[%c0_34, %c0_35] : memref<128x128xf32, #tpu.memory_space<vmem>>, vector<128x128xf32>
    %c0_36 = arith.constant 0 : index
    %c0_37 = arith.constant 0 : index
    %50 = vector.load %arg15[%c0_36, %c0_37] : memref<128x128xf32, #tpu.memory_space<vmem>>, vector<128x128xf32>
    %cst_38 = arith.constant dense<0.000000e+00> : vector<16x128xf32>
    %51 = tpu.matmul %46, %49, %cst_38 {dimension_numbers = #tpu.dot_dimension_numbers<[1], [0], [0], [1], [0, 0, 1, 1], [], []>} : vector<16x128xf32>, vector<128x128xf32>, vector<16x128xf32> -> vector<16x128xf32>
    %cst_39 = arith.constant dense<0.000000e+00> : vector<16x128xf32>
    %52 = tpu.matmul %48, %50, %cst_39 {dimension_numbers = #tpu.dot_dimension_numbers<[1], [0], [0], [1], [0, 0, 1, 1], [], []>} : vector<16x128xf32>, vector<128x128xf32>, vector<16x128xf32> -> vector<16x128xf32>
    %53 = arith.addf %46, %48 : vector<16x128xf32>
    %54 = arith.addf %49, %50 : vector<128x128xf32>
    %cst_40 = arith.constant dense<0.000000e+00> : vector<16x128xf32>
    %55 = tpu.matmul %53, %54, %cst_40 {dimension_numbers = #tpu.dot_dimension_numbers<[1], [0], [0], [1], [0, 0, 1, 1], [], []>} : vector<16x128xf32>, vector<128x128xf32>, vector<16x128xf32> -> vector<16x128xf32>
    %56 = arith.subf %51, %52 : vector<16x128xf32>
    %57 = arith.subf %55, %51 : vector<16x128xf32>
    %58 = arith.subf %57, %52 : vector<16x128xf32>
    %59 = arith.mulf %8, %56 : vector<16x128xf32>
    %60 = arith.mulf %9, %58 : vector<16x128xf32>
    %61 = arith.addf %59, %60 : vector<16x128xf32>
    %62 = arith.mulf %8, %58 : vector<16x128xf32>
    %63 = arith.mulf %9, %56 : vector<16x128xf32>
    %64 = arith.subf %62, %63 : vector<16x128xf32>
    %c0_41 = arith.constant 0 : index
    %c0_42 = arith.constant 0 : index
    %65 = vector.load %arg21[%c0_41, %c0_42] : memref<16x16xf32, #tpu.memory_space<vmem>>, vector<16x16xf32>
    %c0_43 = arith.constant 0 : index
    %c0_44 = arith.constant 0 : index
    %66 = vector.load %arg17[%c0_43, %c0_44] : memref<128x16xf32, #tpu.memory_space<vmem>>, vector<128x16xf32>
    %cst_45 = arith.constant dense<0.000000e+00> : vector<16x16xf32>
    %67 = tpu.matmul %61, %66, %cst_45 {dimension_numbers = #tpu.dot_dimension_numbers<[1], [0], [0], [1], [0, 0, 1, 1], [], []>} : vector<16x128xf32>, vector<128x16xf32>, vector<16x16xf32> -> vector<16x16xf32>
    %68 = arith.addf %65, %67 : vector<16x16xf32>
    %c0_46 = arith.constant 0 : index
    %c0_47 = arith.constant 0 : index
    %69 = vector.load %arg21[%c0_46, %c0_47] : memref<16x16xf32, #tpu.memory_space<vmem>>, vector<16x16xf32>
    tpu.vector_store %arg21[%c0_46, %c0_47], %68 {strides = array<i32>} : memref<16x16xf32, #tpu.memory_space<vmem>>, vector<16x16xf32>,
    %c0_48 = arith.constant 0 : index
    %c0_49 = arith.constant 0 : index
    %70 = vector.load %arg22[%c0_48, %c0_49] : memref<16x16xf32, #tpu.memory_space<vmem>>, vector<16x16xf32>
    %c0_50 = arith.constant 0 : index
    %c0_51 = arith.constant 0 : index
    %71 = vector.load %arg17[%c0_50, %c0_51] : memref<128x16xf32, #tpu.memory_space<vmem>>, vector<128x16xf32>
    %cst_52 = arith.constant dense<0.000000e+00> : vector<16x16xf32>
    %72 = tpu.matmul %64, %71, %cst_52 {dimension_numbers = #tpu.dot_dimension_numbers<[1], [0], [0], [1], [0, 0, 1, 1], [], []>} : vector<16x128xf32>, vector<128x16xf32>, vector<16x16xf32> -> vector<16x16xf32>
    %73 = arith.addf %70, %72 : vector<16x16xf32>
    %c0_53 = arith.constant 0 : index
    %c0_54 = arith.constant 0 : index
    %74 = vector.load %arg22[%c0_53, %c0_54] : memref<16x16xf32, #tpu.memory_space<vmem>>, vector<16x16xf32>
    tpu.vector_store %arg22[%c0_53, %c0_54], %73 {strides = array<i32>} : memref<16x16xf32, #tpu.memory_space<vmem>>, vector<16x16xf32>,
    %c1_i32 = arith.constant 1 : i32
    %75 = arith.cmpi eq, %arg0, %c1_i32 : i32
    %76 = arith.extui %75 : i1 to i32
    %c0_i32_55 = arith.constant 0 : i32
    %77 = arith.cmpi ne, %76, %c0_i32_55 : i32
    scf.if %77 {
      %c0_56 = arith.constant 0 : index
      %78 = memref.load %arg18[%c0_56] : memref<1xf32, #tpu.memory_space<smem>>
      %c0_57 = arith.constant 0 : index
      %c0_58 = arith.constant 0 : index
      %79 = vector.load %arg21[%c0_57, %c0_58] : memref<16x16xf32, #tpu.memory_space<vmem>>, vector<16x16xf32>
      %c0_59 = arith.constant 0 : index
      %c0_60 = arith.constant 0 : index
      %80 = vector.load %arg3[%c0_59, %c0_60] : memref<16x16xf32, #tpu.memory_space<vmem>>, vector<16x16xf32>
      %81 = arith.subf %79, %80 : vector<16x16xf32>
      %82 = vector.broadcast %78 : f32 to vector<16x16xf32>
      %83 = arith.mulf %82, %81 : vector<16x16xf32>
      %84 = arith.subf %3, %83 : vector<16x16xf32>
      %c0_61 = arith.constant 0 : index
      %c0_62 = arith.constant 0 : index
      %85 = vector.load %arg19[%c0_61, %c0_62] : memref<16x16xf32, #tpu.memory_space<vmem>>, vector<16x16xf32>
      tpu.vector_store %arg19[%c0_61, %c0_62], %84 {strides = array<i32>} : memref<16x16xf32, #tpu.memory_space<vmem>>, vector<16x16xf32>,
      %c0_63 = arith.constant 0 : index
      %c0_64 = arith.constant 0 : index
      %86 = vector.load %arg22[%c0_63, %c0_64] : memref<16x16xf32, #tpu.memory_space<vmem>>, vector<16x16xf32>
      %c0_65 = arith.constant 0 : index
      %c0_66 = arith.constant 0 : index
      %87 = vector.load %arg4[%c0_65, %c0_66] : memref<16x16xf32, #tpu.memory_space<vmem>>, vector<16x16xf32>
      %88 = arith.subf %86, %87 : vector<16x16xf32>
      %89 = vector.broadcast %78 : f32 to vector<16x16xf32>
      %90 = arith.mulf %89, %88 : vector<16x16xf32>
      %91 = arith.subf %4, %90 : vector<16x16xf32>
      %c0_67 = arith.constant 0 : index
      %c0_68 = arith.constant 0 : index
      %92 = vector.load %arg20[%c0_67, %c0_68] : memref<16x16xf32, #tpu.memory_space<vmem>>, vector<16x16xf32>
      tpu.vector_store %arg20[%c0_67, %c0_68], %91 {strides = array<i32>} : memref<16x16xf32, #tpu.memory_space<vmem>>, vector<16x16xf32>,
    } else {
    }
    return
  }
  func.func @transform_0(%arg0: i32) -> (i32, i32) {
    %c0_i32 = arith.constant 0 : i32
    %c0_i32_0 = arith.constant 0 : i32
    %c0_i32_1 = arith.constant 0 : i32
    return %c0_i32, %c0_i32_0 : i32, i32
  }
  func.func @transform_1(%arg0: i32) -> (i32, i32) {
    %c0_i32 = arith.constant 0 : i32
    %c0_i32_0 = arith.constant 0 : i32
    %c0_i32_1 = arith.constant 0 : i32
    return %c0_i32, %c0_i32_0 : i32, i32
  }
  func.func @transform_2(%arg0: i32) -> (i32, i32) {
    %c0_i32 = arith.constant 0 : i32
    %c0_i32_0 = arith.constant 0 : i32
    %c0_i32_1 = arith.constant 0 : i32
    return %c0_i32, %c0_i32_0 : i32, i32
  }
  func.func @transform_3(%arg0: i32) -> (i32, i32) {
    %c0_i32 = arith.constant 0 : i32
    %c0_i32_0 = arith.constant 0 : i32
    %c0_i32_1 = arith.constant 0 : i32
    return %c0_i32, %c0_i32_0 : i32, i32
  }
  func.func @transform_4(%arg0: i32) -> (i32, i32) {
    %c0_i32 = arith.constant 0 : i32
    %c0_i32_0 = arith.constant 0 : i32
    return %c0_i32, %arg0 : i32, i32
  }
  func.func @transform_5(%arg0: i32) -> (i32, i32) {
    %c0_i32 = arith.constant 0 : i32
    %c0_i32_0 = arith.constant 0 : i32
    return %c0_i32, %arg0 : i32, i32
  }
  func.func @transform_6(%arg0: i32) -> (i32, i32) {
    %c0_i32 = arith.constant 0 : i32
    %c0_i32_0 = arith.constant 0 : i32
    return %c0_i32, %arg0 : i32, i32
  }
  func.func @transform_7(%arg0: i32) -> (i32, i32) {
    %c0_i32 = arith.constant 0 : i32
    %c0_i32_0 = arith.constant 0 : i32
    %c0_i32_1 = arith.constant 0 : i32
    return %c0_i32, %c0_i32_0 : i32, i32
  }
  func.func @transform_8(%arg0: i32) -> (i32, i32) {
    %c0_i32 = arith.constant 0 : i32
    %c0_i32_0 = arith.constant 0 : i32
    %c0_i32_1 = arith.constant 0 : i32
    return %c0_i32, %c0_i32_0 : i32, i32
  }
  func.func @transform_9(%arg0: i32) -> (i32, i32) {
    %c0_i32 = arith.constant 0 : i32
    %c0_i32_0 = arith.constant 0 : i32
    %c0_i32_1 = arith.constant 0 : i32
    return %c0_i32, %c0_i32_0 : i32, i32
  }
  func.func @transform_10(%arg0: i32) -> (i32, i32) {
    %c0_i32 = arith.constant 0 : i32
    %c0_i32_0 = arith.constant 0 : i32
    %c0_i32_1 = arith.constant 0 : i32
    return %c0_i32, %c0_i32_0 : i32, i32
  }
  func.func @transform_11(%arg0: i32) -> (i32, i32) {
    %c0_i32 = arith.constant 0 : i32
    %c0_i32_0 = arith.constant 0 : i32
    %c0_i32_1 = arith.constant 0 : i32
    return %c0_i32, %c0_i32_0 : i32, i32
  }
  func.func @transform_12(%arg0: i32) -> (i32, i32) {
    %c0_i32 = arith.constant 0 : i32
    %c0_i32_0 = arith.constant 0 : i32
    %c0_i32_1 = arith.constant 0 : i32
    return %c0_i32, %c0_i32_0 : i32, i32
  }
  func.func @transform_13(%arg0: i32) -> (i32, i32) {
    %c0_i32 = arith.constant 0 : i32
    %c0_i32_0 = arith.constant 0 : i32
    %c0_i32_1 = arith.constant 0 : i32
    return %c0_i32, %c0_i32_0 : i32, i32
  }
  func.func @transform_14(%arg0: i32) -> (i32, i32) {
    %c0_i32 = arith.constant 0 : i32
    %c0_i32_0 = arith.constant 0 : i32
    %c0_i32_1 = arith.constant 0 : i32
    return %c0_i32, %c0_i32_0 : i32, i32
  }
  func.func @transform_15(%arg0: i32) -> (i32, i32) {
    %c0_i32 = arith.constant 0 : i32
    %c0_i32_0 = arith.constant 0 : i32
    %c0_i32_1 = arith.constant 0 : i32
    return %c0_i32, %c0_i32_0 : i32, i32
  }
  func.func @transform_16(%arg0: i32) -> (i32, i32) {
    %c0_i32 = arith.constant 0 : i32
    %c0_i32_0 = arith.constant 0 : i32
    %c0_i32_1 = arith.constant 0 : i32
    return %c0_i32, %c0_i32_0 : i32, i32
  }
  func.func @transform_17(%arg0: i32) -> i32 {
    %c0_i32 = arith.constant 0 : i32
    %c0_i32_0 = arith.constant 0 : i32
    return %c0_i32 : i32
  }
  func.func @transform_18(%arg0: i32) -> (i32, i32) {
    %c0_i32 = arith.constant 0 : i32
    %c0_i32_0 = arith.constant 0 : i32
    %c0_i32_1 = arith.constant 0 : i32
    return %c0_i32, %c0_i32_0 : i32, i32
  }
  func.func @transform_19(%arg0: i32) -> (i32, i32) {
    %c0_i32 = arith.constant 0 : i32
    %c0_i32_0 = arith.constant 0 : i32
    %c0_i32_1 = arith.constant 0 : i32
    return %c0_i32, %c0_i32_0 : i32, i32
  }
}

</mosaic_0001>

<llo_original>
// kernel: custom-call.5
$region0: #{custom-call.5}
  %s0 = inlined_call_operand.hbm [shape: c64[1,16,16,16], index: 0, kind: input, shape index: {}]
  %s1 = inlined_call_operand.vmem [shape: f32[1,16,16,16], index: 1, kind: output, shape index: {}]
  %s2 = scalar_lea.hbm %s0, 4096
  $region1: #{custom-call.5} parent=0
    #allocation0 [shape = 's32[1]{0}', space=sflag, size = 0x4, scoped, tag = 'scoped memory for custom-call.5']
    %3 = vsyncpa [#allocation0], 0
    %s4 = sshll.u32 %s1, 4
    %s5 = int_to_ptr.vmem [resolvable:$true] %s4
    %7 = dma.hbm_to_vmem [thread:$0]  %s2, 4096, %s5, [#allocation0]
    %8 = dma.done [#allocation0], 4096
    %9 = vsyncpa [#allocation0], 1

// kernel: custom-call.4
$region0: #{custom-call.4}
  %s0 = inlined_call_operand.hbm [shape: c64[1,16,16,16], index: 0, kind: input, shape index: {}]
  %s1 = inlined_call_operand.vmem [shape: f32[1,16,16,16], index: 1, kind: output, shape index: {}]
  $region1: #{custom-call.4} parent=0
    #allocation0 [shape = 's32[1]{0}', space=sflag, size = 0x4, scoped, tag = 'scoped memory for custom-call.4']
    %2 = vsyncpa [#allocation0], 0
    %s3 = sshll.u32 %s1, 4
    %s4 = int_to_ptr.vmem [resolvable:$true] %s3
    %6 = dma.hbm_to_vmem [thread:$0]  %s0, 4096, %s4, [#allocation0]
    %7 = dma.done [#allocation0], 4096
    %8 = vsyncpa [#allocation0], 1

// kernel: custom-call
$region0: #{custom-call}
  %s0 = inlined_call_operand.hbm [shape: c64[1,1,16,16], index: 0, kind: input, shape index: {}]
  %s1 = inlined_call_operand.vmem [shape: f32[1,1,16,16], index: 1, kind: output, shape index: {}]
  $region1: #{custom-call} parent=0
    #allocation0 [shape = 's32[1]{0}', space=sflag, size = 0x4, scoped, tag = 'scoped memory for custom-call']
    %2 = vsyncpa [#allocation0], 0
    %s3 = sshll.u32 %s1, 4
    %s4 = int_to_ptr.vmem [resolvable:$true] %s3
    %6 = dma.hbm_to_vmem [thread:$0]  %s0, 256, %s4, [#allocation0]
    %7 = dma.done [#allocation0], 256
    %8 = vsyncpa [#allocation0], 1

// kernel: custom-call.1
$region0: #{custom-call.1}
  %s0 = inlined_call_operand.hbm [shape: c64[1,1,16,16], index: 0, kind: input, shape index: {}]
  %s1 = inlined_call_operand.vmem [shape: f32[1,1,16,16], index: 1, kind: output, shape index: {}]
  %s2 = scalar_lea.hbm %s0, 256
  $region1: #{custom-call.1} parent=0
    #allocation0 [shape = 's32[1]{0}', space=sflag, size = 0x4, scoped, tag = 'scoped memory for custom-call.1']
    %3 = vsyncpa [#allocation0], 0
    %s4 = sshll.u32 %s1, 4
    %s5 = int_to_ptr.vmem [resolvable:$true] %s4
    %7 = dma.hbm_to_vmem [thread:$0]  %s2, 256, %s5, [#allocation0]
    %8 = dma.done [#allocation0], 256
    %9 = vsyncpa [#allocation0], 1

// kernel: custom-call.6
$region0: #{custom-call.6}
  %s0 = inlined_call_operand.vmem [shape: f32[1,1,16,16], index: 0, kind: input, shape index: {}]
  %s1 = inlined_call_operand.vmem [shape: f32[1,1,16,16], index: 1, kind: input, shape index: {}]
  %s2 = inlined_call_operand.hbm [shape: c64[1,1,16,16], index: 2, kind: output, shape index: {}]
  %s3 = scalar_lea.hbm %s2, 256
  $region1: #{custom-call.6} parent=0
    #allocation0 [shape = 's32[1]{0}', space=sflag, size = 0x4, scoped, tag = 'scoped memory for custom-call.6']
    %4 = vsyncpa [#allocation0], 0
    %s5 = sshll.u32 %s0, 4
    %s6 = int_to_ptr.vmem [resolvable:$true] %s5
    %8 = dma.vmem_to_hbm [thread:$0]  %s6, 256, %s2, [#allocation0]
    %9 = dma.done [#allocation0], 256
    %10 = vsyncpa [#allocation0], 1
  $region2: #{custom-call.6} parent=0
    #allocation1 [shape = 's32[1]{0}', space=sflag, size = 0x4, scoped, tag = 'scoped memory for custom-call.6']
    %11 = vsyncpa [#allocation1], 0
    %s12 = sshll.u32 %s1, 4
    %s13 = int_to_ptr.vmem [resolvable:$true] %s12
    %15 = dma.vmem_to_hbm [thread:$0]  %s13, 256, %s3, [#allocation1]
    %16 = dma.done [#allocation1], 256
    %17 = vsyncpa [#allocation1], 1

// kernel: _dc_call.1
$region0: #{_dc_call.1}
  #allocation0 [shape = 'u32[]', space=smem, size = 0x4, offset = 0x4, fixed_abs, tag = 'smem constant byte address 0x4 - core index']
  #allocation1 [shape = 'u32[144,128]{1,0:T(1,128)}', space=vmem, size = 0x12000, scoped, tag = 'internal scratch']
  #allocation2 [shape = 'f32[16,16]{1,0:T(8,128)}', space=vmem, size = 0x2000, scoped, tag = 'scratch operand']
  #allocation3 [shape = 'f32[16,16]{1,0:T(8,128)}', space=vmem, size = 0x2000, scoped, tag = 'scratch operand']
  #allocation4 [shape = 'f32[1]{0:T(128)S(6)}', space=smem, size = 0x200, scoped, tag = 'scoped memory for _dc_call.1']
  %s0 = inlined_call_operand.vmem [shape: f32[16,16], index: 0, kind: input, shape index: {}]
  %s1 = inlined_call_operand.vmem [shape: f32[16,16], index: 1, kind: input, shape index: {}]
  %s2 = inlined_call_operand.vmem [shape: f32[16,16], index: 2, kind: input, shape index: {}]
  %s3 = inlined_call_operand.vmem [shape: f32[16,16], index: 3, kind: input, shape index: {}]
  %s4 = inlined_call_operand.vmem [shape: f32[16,256], index: 4, kind: input, shape index: {}]
  %s5 = inlined_call_operand.vmem [shape: f32[16,256], index: 5, kind: input, shape index: {}]
  %s6 = inlined_call_operand.vmem [shape: f32[16,256], index: 6, kind: input, shape index: {}]
  %s7 = inlined_call_operand.vmem [shape: f32[16,16], index: 7, kind: input, shape index: {}]
  %s8 = inlined_call_operand.vmem [shape: f32[16,16], index: 8, kind: input, shape index: {}]
  %s9 = inlined_call_operand.vmem [shape: f32[128,128], index: 9, kind: input, shape index: {}]
  %s10 = inlined_call_operand.vmem [shape: f32[128,128], index: 10, kind: input, shape index: {}]
  %s11 = inlined_call_operand.vmem [shape: f32[16,16], index: 11, kind: input, shape index: {}]
  %s12 = inlined_call_operand.vmem [shape: f32[16,16], index: 12, kind: input, shape index: {}]
  %s13 = inlined_call_operand.vmem [shape: f32[128,128], index: 13, kind: input, shape index: {}]
  %s14 = inlined_call_operand.vmem [shape: f32[128,128], index: 14, kind: input, shape index: {}]
  %s15 = inlined_call_operand.vmem [shape: f32[16,128], index: 15, kind: input, shape index: {}]
  %s16 = inlined_call_operand.vmem [shape: f32[128,16], index: 16, kind: input, shape index: {}]
  %s17 = inlined_call_operand.<no memory space> [shape: f32[1], index: 17, kind: input, shape index: {}]
  %s18 = inlined_call_operand.vmem [shape: f32[16,16], index: 18, kind: output, shape index: {0}]
  %s19 = inlined_call_operand.vmem [shape: f32[16,16], index: 19, kind: output, shape index: {1}]
  %20 = xla_tuple %s18, %s19
  %s21 = sld [smem:[#allocation0]]
  $region235: #{_dc_call.1} parent=0
    _
  %s23 = ssub.s32 1, %s21
  %s24 = scalar_select 0, %s23, %s21
  %25 = sst [smem:[#allocation4]] %s17
  $region1: #{_dc_call.1} parent=0
    #allocation5 [shape = 'u8[16384]{0}', space=vmem, size = 0x4000, scoped, tag = 'input window, operand 4']
    #allocation6 [shape = 'u8[16384]{0}', space=vmem, size = 0x4000, scoped, tag = 'input window, operand 5']
    #allocation7 [shape = 'u8[16384]{0}', space=vmem, size = 0x4000, scoped, tag = 'input window, operand 6']
    loop: start=0, step=1, limit=4
    $region2: #{_dc_call.1} parent=1 // loop_pre_header
      _
    $region3: #{_dc_call.1} parent=1 // loop_header
      %s27 = sphi 0, %s31
      %p28 = scmp.ge.s32.totalorder %s27, 4
      %s35 = sphi 0, %s35
      %s37 = sphi 0, %s35
      %s38 = sphi 0, %s37
      %s52 = sphi 0, %s38
      %s56 = sphi 0, %s56
      %s58 = sphi 0, %s56
      %s59 = sphi 0, %s58
      %s73 = sphi 0, %s59
      %s77 = sphi 0, %s77
      %s79 = sphi 0, %s77
      %s80 = sphi 0, %s79
      %s94 = sphi 0, %s80
      %s98 = sphi 0, %s98
      %s100 = sphi 0, %s98
      %s101 = sphi 0, %s100
      %s115 = sphi 0, %s101
      %s121 = sphi 0, %s123
      %s124 = sphi 0, %s121
      %s125 = sphi 0, %s124
      %s141 = sphi 0, %s125
      %s147 = sphi 0, %s149
      %s150 = sphi 0, %s147
      %s151 = sphi 0, %s150
      %s167 = sphi 0, %s151
      %s173 = sphi 0, %s175
      %s176 = sphi 0, %s173
      %s177 = sphi 0, %s176
      %s193 = sphi 0, %s177
      %s197 = sphi 0, %s197
      %s199 = sphi 0, %s197
      %s200 = sphi 0, %s199
      %s214 = sphi 0, %s200
      %s218 = sphi 0, %s218
      %s220 = sphi 0, %s218
      %s221 = sphi 0, %s220
      %s235 = sphi 0, %s221
      %s239 = sphi 0, %s239
      %s241 = sphi 0, %s239
      %s242 = sphi 0, %s241
      %s256 = sphi 0, %s242
      %s260 = sphi 0, %s260
      %s262 = sphi 0, %s260
      %s263 = sphi 0, %s262
      %s277 = sphi 0, %s263
      %s281 = sphi 0, %s281
      %s283 = sphi 0, %s281
      %s284 = sphi 0, %s283
      %s298 = sphi 0, %s284
      %s302 = sphi 0, %s302
      %s304 = sphi 0, %s302
      %s305 = sphi 0, %s304
      %s319 = sphi 0, %s305
      %s323 = sphi 0, %s323
      %s325 = sphi 0, %s323
      %s326 = sphi 0, %s325
      %s340 = sphi 0, %s326
      %s344 = sphi 0, %s344
      %s346 = sphi 0, %s344
      %s347 = sphi 0, %s346
      %s361 = sphi 0, %s347
      %s365 = sphi 0, %s365
      %s367 = sphi 0, %s365
      %s368 = sphi 0, %s367
      %s382 = sphi 0, %s368
      %s386 = sphi 0, %s386
      %s388 = sphi 0, %s386
      %s389 = sphi 0, %s388
      %s403 = sphi 0, %s389
      %s407 = sphi 0, %s407
      %s409 = sphi 0, %s407
      %s410 = sphi 0, %s409
      %s424 = sphi 0, %s410
      %s428 = sphi 0, %s428
      %s430 = sphi 0, %s428
      %s431 = sphi 0, %s430
      %s445 = sphi 0, %s431
      %s449 = sphi 0, %s449
      %s451 = sphi 0, %s449
      %s452 = sphi 0, %s451
      %s466 = sphi 0, %s452
    $region4: #{_dc_call.1} parent=1 // loop_header_branch
      %30 = sbr.rel (%p28) target = $region8
    $region5: #{_dc_call.1} parent=1 // loop_body
      %s32 = ssub.s32 %s27, 1
      %s33 = ssub.s32 %s27, 2
      %s34 = sadd.s32 %s27, 1
      %s36 = sadd.s32 %s35, 1
      %p39 = scmp.eq.s32.totalorder %s27, 1
      %p40 = scmp.ne.s32.totalorder %s35, %s37
      %p41 = scmp.eq.s32.totalorder %s27, 0
      %p42 = por %p40, %p41
      %p43 = scmp.ne.s32.totalorder %s35, %s37
      %p44 = scmp.eq.s32.totalorder %s32, 1
      %p45 = por %p43, %p44
      %p46 = scmp.ne.s32.totalorder %s37, %s38
      %p47 = scmp.eq.s32.totalorder %s32, 0
      %p48 = por %p46, %p47
      %p49 = scmp.ne.s32.totalorder %s37, %s38
      %p50 = scmp.eq.s32.totalorder %s33, 1
      %p51 = por %p49, %p50
      %p53 = scmp.ne.s32.totalorder %s38, %s52
      %p54 = scmp.eq.s32.totalorder %s33, 0
      %p55 = por %p53, %p54
      %s57 = sadd.s32 %s56, 1
      %p60 = scmp.eq.s32.totalorder %s27, 1
      %p61 = scmp.ne.s32.totalorder %s56, %s58
      %p62 = scmp.eq.s32.totalorder %s27, 0
      %p63 = por %p61, %p62
      %p64 = scmp.ne.s32.totalorder %s56, %s58
      %p65 = scmp.eq.s32.totalorder %s32, 1
      %p66 = por %p64, %p65
      %p67 = scmp.ne.s32.totalorder %s58, %s59
      %p68 = scmp.eq.s32.totalorder %s32, 0
      %p69 = por %p67, %p68
      %p70 = scmp.ne.s32.totalorder %s58, %s59
      %p71 = scmp.eq.s32.totalorder %s33, 1
      %p72 = por %p70, %p71
      %p74 = scmp.ne.s32.totalorder %s59, %s73
      %p75 = scmp.eq.s32.totalorder %s33, 0
      %p76 = por %p74, %p75
      %s78 = sadd.s32 %s77, 1
      %p81 = scmp.eq.s32.totalorder %s27, 1
      %p82 = scmp.ne.s32.totalorder %s77, %s79
      %p83 = scmp.eq.s32.totalorder %s27, 0
      %p84 = por %p82, %p83
      %p85 = scmp.ne.s32.totalorder %s77, %s79
      %p86 = scmp.eq.s32.totalorder %s32, 1
      %p87 = por %p85, %p86
      %p88 = scmp.ne.s32.totalorder %s79, %s80
      %p89 = scmp.eq.s32.totalorder %s32, 0
      %p90 = por %p88, %p89
      %p91 = scmp.ne.s32.totalorder %s79, %s80
      %p92 = scmp.eq.s32.totalorder %s33, 1
      %p93 = por %p91, %p92
      %p95 = scmp.ne.s32.totalorder %s80, %s94
      %p96 = scmp.eq.s32.totalorder %s33, 0
      %p97 = por %p95, %p96
      %s99 = sadd.s32 %s98, 1
      %p102 = scmp.eq.s32.totalorder %s27, 1
      %p103 = scmp.ne.s32.totalorder %s98, %s100
      %p104 = scmp.eq.s32.totalorder %s27, 0
      %p105 = por %p103, %p104
      %p106 = scmp.ne.s32.totalorder %s98, %s100
      %p107 = scmp.eq.s32.totalorder %s32, 1
      %p108 = por %p106, %p107
      %p109 = scmp.ne.s32.totalorder %s100, %s101
      %p110 = scmp.eq.s32.totalorder %s32, 0
      %p111 = por %p109, %p110
      %p112 = scmp.ne.s32.totalorder %s100, %s101
      %p113 = scmp.eq.s32.totalorder %s33, 1
      %p114 = por %p112, %p113
      %p116 = scmp.ne.s32.totalorder %s101, %s115
      %p117 = scmp.eq.s32.totalorder %s33, 0
      %p118 = por %p116, %p117
      %s119 = ssub.s32 %s27, %s34
      %p120 = scmp.eq.s32.totalorder %s119, 0
      %s122 = sadd.s32 %s121, 1
      %s123 = scalar_select %p120, %s121, %s122
      %p126 = pneg %p120
      %p127 = scmp.eq.s32.totalorder %s27, 1
      %p128 = por %p126, %p127
      %p129 = scmp.ne.s32.totalorder %s121, %s124
      %p130 = scmp.eq.s32.totalorder %s27, 0
      %p131 = por %p129, %p130
      %p132 = scmp.ne.s32.totalorder %s121, %s124
      %p133 = scmp.eq.s32.totalorder %s32, 1
      %p134 = por %p132, %p133
      %p135 = scmp.ne.s32.totalorder %s124, %s125
      %p136 = scmp.eq.s32.totalorder %s32, 0
      %p137 = por %p135, %p136
      %p138 = scmp.ne.s32.totalorder %s124, %s125
      %p139 = scmp.eq.s32.totalorder %s33, 1
      %p140 = por %p138, %p139
      %p142 = scmp.ne.s32.totalorder %s125, %s141
      %p143 = scmp.eq.s32.totalorder %s33, 0
      %p144 = por %p142, %p143
      %s145 = ssub.s32 %s27, %s34
      %p146 = scmp.eq.s32.totalorder %s145, 0
      %s148 = sadd.s32 %s147, 1
      %s149 = scalar_select %p146, %s147, %s148
      %p152 = pneg %p146
      %p153 = scmp.eq.s32.totalorder %s27, 1
      %p154 = por %p152, %p153
      %p155 = scmp.ne.s32.totalorder %s147, %s150
      %p156 = scmp.eq.s32.totalorder %s27, 0
      %p157 = por %p155, %p156
      %p158 = scmp.ne.s32.totalorder %s147, %s150
      %p159 = scmp.eq.s32.totalorder %s32, 1
      %p160 = por %p158, %p159
      %p161 = scmp.ne.s32.totalorder %s150, %s151
      %p162 = scmp.eq.s32.totalorder %s32, 0
      %p163 = por %p161, %p162
      %p164 = scmp.ne.s32.totalorder %s150, %s151
      %p165 = scmp.eq.s32.totalorder %s33, 1
      %p166 = por %p164, %p165
      %p168 = scmp.ne.s32.totalorder %s151, %s167
      %p169 = scmp.eq.s32.totalorder %s33, 0
      %p170 = por %p168, %p169
      %s171 = ssub.s32 %s27, %s34
      %p172 = scmp.eq.s32.totalorder %s171, 0
      %s174 = sadd.s32 %s173, 1
      %s175 = scalar_select %p172, %s173, %s174
      %p178 = pneg %p172
      %p179 = scmp.eq.s32.totalorder %s27, 1
      %p180 = por %p178, %p179
      %p181 = scmp.ne.s32.totalorder %s173, %s176
      %p182 = scmp.eq.s32.totalorder %s27, 0
      %p183 = por %p181, %p182
      %p184 = scmp.ne.s32.totalorder %s173, %s176
      %p185 = scmp.eq.s32.totalorder %s32, 1
      %p186 = por %p184, %p185
      %p187 = scmp.ne.s32.totalorder %s176, %s177
      %p188 = scmp.eq.s32.totalorder %s32, 0
      %p189 = por %p187, %p188
      %p190 = scmp.ne.s32.totalorder %s176, %s177
      %p191 = scmp.eq.s32.totalorder %s33, 1
      %p192 = por %p190, %p191
      %p194 = scmp.ne.s32.totalorder %s177, %s193
      %p195 = scmp.eq.s32.totalorder %s33, 0
      %p196 = por %p194, %p195
      %s198 = sadd.s32 %s197, 1
      %p201 = scmp.eq.s32.totalorder %s27, 1
      %p202 = scmp.ne.s32.totalorder %s197, %s199
      %p203 = scmp.eq.s32.totalorder %s27, 0
      %p204 = por %p202, %p203
      %p205 = scmp.ne.s32.totalorder %s197, %s199
      %p206 = scmp.eq.s32.totalorder %s32, 1
      %p207 = por %p205, %p206
      %p208 = scmp.ne.s32.totalorder %s199, %s200
      %p209 = scmp.eq.s32.totalorder %s32, 0
      %p210 = por %p208, %p209
      %p211 = scmp.ne.s32.totalorder %s199, %s200
      %p212 = scmp.eq.s32.totalorder %s33, 1
      %p213 = por %p211, %p212
      %p215 = scmp.ne.s32.totalorder %s200, %s214
      %p216 = scmp.eq.s32.totalorder %s33, 0
      %p217 = por %p215, %p216
      %s219 = sadd.s32 %s218, 1
      %p222 = scmp.eq.s32.totalorder %s27, 1
      %p223 = scmp.ne.s32.totalorder %s218, %s220
      %p224 = scmp.eq.s32.totalorder %s27, 0
      %p225 = por %p223, %p224
      %p226 = scmp.ne.s32.totalorder %s218, %s220
      %p227 = scmp.eq.s32.totalorder %s32, 1
      %p228 = por %p226, %p227
      %p229 = scmp.ne.s32.totalorder %s220, %s221
      %p230 = scmp.eq.s32.totalorder %s32, 0
      %p231 = por %p229, %p230
      %p232 = scmp.ne.s32.totalorder %s220, %s221
      %p233 = scmp.eq.s32.totalorder %s33, 1
      %p234 = por %p232, %p233
      %p236 = scmp.ne.s32.totalorder %s221, %s235
      %p237 = scmp.eq.s32.totalorder %s33, 0
      %p238 = por %p236, %p237
      %s240 = sadd.s32 %s239, 1
      %p243 = scmp.eq.s32.totalorder %s27, 1
      %p244 = scmp.ne.s32.totalorder %s239, %s241
      %p245 = scmp.eq.s32.totalorder %s27, 0
      %p246 = por %p244, %p245
      %p247 = scmp.ne.s32.totalorder %s239, %s241
      %p248 = scmp.eq.s32.totalorder %s32, 1
      %p249 = por %p247, %p248
      %p250 = scmp.ne.s32.totalorder %s241, %s242
      %p251 = scmp.eq.s32.totalorder %s32, 0
      %p252 = por %p250, %p251
      %p253 = scmp.ne.s32.totalorder %s241, %s242
      %p254 = scmp.eq.s32.totalorder %s33, 1
      %p255 = por %p253, %p254
      %p257 = scmp.ne.s32.totalorder %s242, %s256
      %p258 = scmp.eq.s32.totalorder %s33, 0
      %p259 = por %p257, %p258
      %s261 = sadd.s32 %s260, 1
      %p264 = scmp.eq.s32.totalorder %s27, 1
      %p265 = scmp.ne.s32.totalorder %s260, %s262
      %p266 = scmp.eq.s32.totalorder %s27, 0
      %p267 = por %p265, %p266
      %p268 = scmp.ne.s32.totalorder %s260, %s262
      %p269 = scmp.eq.s32.totalorder %s32, 1
      %p270 = por %p268, %p269
      %p271 = scmp.ne.s32.totalorder %s262, %s263
      %p272 = scmp.eq.s32.totalorder %s32, 0
      %p273 = por %p271, %p272
      %p274 = scmp.ne.s32.totalorder %s262, %s263
      %p275 = scmp.eq.s32.totalorder %s33, 1
      %p276 = por %p274, %p275
      %p278 = scmp.ne.s32.totalorder %s263, %s277
      %p279 = scmp.eq.s32.totalorder %s33, 0
      %p280 = por %p278, %p279
      %s282 = sadd.s32 %s281, 1
      %p285 = scmp.eq.s32.totalorder %s27, 1
      %p286 = scmp.ne.s32.totalorder %s281, %s283
      %p287 = scmp.eq.s32.totalorder %s27, 0
      %p288 = por %p286, %p287
      %p289 = scmp.ne.s32.totalorder %s281, %s283
      %p290 = scmp.eq.s32.totalorder %s32, 1
      %p291 = por %p289, %p290
      %p292 = scmp.ne.s32.totalorder %s283, %s284
      %p293 = scmp.eq.s32.totalorder %s32, 0
      %p294 = por %p292, %p293
      %p295 = scmp.ne.s32.totalorder %s283, %s284
      %p296 = scmp.eq.s32.totalorder %s33, 1
      %p297 = por %p295, %p296
      %p299 = scmp.ne.s32.totalorder %s284, %s298
      %p300 = scmp.eq.s32.totalorder %s33, 0
      %p301 = por %p299, %p300
      %s303 = sadd.s32 %s302, 1
      %p306 = scmp.eq.s32.totalorder %s27, 1
      %p307 = scmp.ne.s32.totalorder %s302, %s304
      %p308 = scmp.eq.s32.totalorder %s27, 0
      %p309 = por %p307, %p308
      %p310 = scmp.ne.s32.totalorder %s302, %s304
      %p311 = scmp.eq.s32.totalorder %s32, 1
      %p312 = por %p310, %p311
      %p313 = scmp.ne.s32.totalorder %s304, %s305
      %p314 = scmp.eq.s32.totalorder %s32, 0
      %p315 = por %p313, %p314
      %p316 = scmp.ne.s32.totalorder %s304, %s305
      %p317 = scmp.eq.s32.totalorder %s33, 1
      %p318 = por %p316, %p317
      %p320 = scmp.ne.s32.totalorder %s305, %s319
      %p321 = scmp.eq.s32.totalorder %s33, 0
      %p322 = por %p320, %p321
      %s324 = sadd.s32 %s323, 1
      %p327 = scmp.eq.s32.totalorder %s27, 1
      %p328 = scmp.ne.s32.totalorder %s323, %s325
      %p329 = scmp.eq.s32.totalorder %s27, 0
      %p330 = por %p328, %p329
      %p331 = scmp.ne.s32.totalorder %s323, %s325
      %p332 = scmp.eq.s32.totalorder %s32, 1
      %p333 = por %p331, %p332
      %p334 = scmp.ne.s32.totalorder %s325, %s326
      %p335 = scmp.eq.s32.totalorder %s32, 0
      %p336 = por %p334, %p335
      %p337 = scmp.ne.s32.totalorder %s325, %s326
      %p338 = scmp.eq.s32.totalorder %s33, 1
      %p339 = por %p337, %p338
      %p341 = scmp.ne.s32.totalorder %s326, %s340
      %p342 = scmp.eq.s32.totalorder %s33, 0
      %p343 = por %p341, %p342
      %s345 = sadd.s32 %s344, 1
      %p348 = scmp.eq.s32.totalorder %s27, 1
      %p349 = scmp.ne.s32.totalorder %s344, %s346
      %p350 = scmp.eq.s32.totalorder %s27, 0
      %p351 = por %p349, %p350
      %p352 = scmp.ne.s32.totalorder %s344, %s346
      %p353 = scmp.eq.s32.totalorder %s32, 1
      %p354 = por %p352, %p353
      %p355 = scmp.ne.s32.totalorder %s346, %s347
      %p356 = scmp.eq.s32.totalorder %s32, 0
      %p357 = por %p355, %p356
      %p358 = scmp.ne.s32.totalorder %s346, %s347
      %p359 = scmp.eq.s32.totalorder %s33, 1
      %p360 = por %p358, %p359
      %p362 = scmp.ne.s32.totalorder %s347, %s361
      %p363 = scmp.eq.s32.totalorder %s33, 0
      %p364 = por %p362, %p363
      %s366 = sadd.s32 %s365, 1
      %p369 = scmp.eq.s32.totalorder %s27, 1
      %p370 = scmp.ne.s32.totalorder %s365, %s367
      %p371 = scmp.eq.s32.totalorder %s27, 0
      %p372 = por %p370, %p371
      %p373 = scmp.ne.s32.totalorder %s365, %s367
      %p374 = scmp.eq.s32.totalorder %s32, 1
      %p375 = por %p373, %p374
      %p376 = scmp.ne.s32.totalorder %s367, %s368
      %p377 = scmp.eq.s32.totalorder %s32, 0
      %p378 = por %p376, %p377
      %p379 = scmp.ne.s32.totalorder %s367, %s368
      %p380 = scmp.eq.s32.totalorder %s33, 1
      %p381 = por %p379, %p380
      %p383 = scmp.ne.s32.totalorder %s368, %s382
      %p384 = scmp.eq.s32.totalorder %s33, 0
      %p385 = por %p383, %p384
      %s387 = sadd.s32 %s386, 1
      %p390 = scmp.eq.s32.totalorder %s27, 1
      %p391 = scmp.ne.s32.totalorder %s386, %s388
      %p392 = scmp.eq.s32.totalorder %s27, 0
      %p393 = por %p391, %p392
      %p394 = scmp.ne.s32.totalorder %s386, %s388
      %p395 = scmp.eq.s32.totalorder %s32, 1
      %p396 = por %p394, %p395
      %p397 = scmp.ne.s32.totalorder %s388, %s389
      %p398 = scmp.eq.s32.totalorder %s32, 0
      %p399 = por %p397, %p398
      %p400 = scmp.ne.s32.totalorder %s388, %s389
      %p401 = scmp.eq.s32.totalorder %s33, 1
      %p402 = por %p400, %p401
      %p404 = scmp.ne.s32.totalorder %s389, %s403
      %p405 = scmp.eq.s32.totalorder %s33, 0
      %p406 = por %p404, %p405
      %s408 = sadd.s32 %s407, 1
      %p411 = scmp.eq.s32.totalorder %s27, 1
      %p412 = scmp.ne.s32.totalorder %s407, %s409
      %p413 = scmp.eq.s32.totalorder %s27, 0
      %p414 = por %p412, %p413
      %p415 = scmp.ne.s32.totalorder %s407, %s409
      %p416 = scmp.eq.s32.totalorder %s32, 1
      %p417 = por %p415, %p416
      %p418 = scmp.ne.s32.totalorder %s409, %s410
      %p419 = scmp.eq.s32.totalorder %s32, 0
      %p420 = por %p418, %p419
      %p421 = scmp.ne.s32.totalorder %s409, %s410
      %p422 = scmp.eq.s32.totalorder %s33, 1
      %p423 = por %p421, %p422
      %p425 = scmp.ne.s32.totalorder %s410, %s424
      %p426 = scmp.eq.s32.totalorder %s33, 0
      %p427 = por %p425, %p426
      %s429 = sadd.s32 %s428, 1
      %p432 = scmp.eq.s32.totalorder %s27, 1
      %p433 = scmp.ne.s32.totalorder %s428, %s430
      %p434 = scmp.eq.s32.totalorder %s27, 0
      %p435 = por %p433, %p434
      %p436 = scmp.ne.s32.totalorder %s428, %s430
      %p437 = scmp.eq.s32.totalorder %s32, 1
      %p438 = por %p436, %p437
      %p439 = scmp.ne.s32.totalorder %s430, %s431
      %p440 = scmp.eq.s32.totalorder %s32, 0
      %p441 = por %p439, %p440
      %p442 = scmp.ne.s32.totalorder %s430, %s431
      %p443 = scmp.eq.s32.totalorder %s33, 1
      %p444 = por %p442, %p443
      %p446 = scmp.ne.s32.totalorder %s431, %s445
      %p447 = scmp.eq.s32.totalorder %s33, 0
      %p448 = por %p446, %p447
      %s450 = sadd.s32 %s449, 1
      %p453 = scmp.eq.s32.totalorder %s27, 1
      %p454 = scmp.ne.s32.totalorder %s449, %s451
      %p455 = scmp.eq.s32.totalorder %s27, 0
      %p456 = por %p454, %p455
      %p457 = scmp.ne.s32.totalorder %s449, %s451
      %p458 = scmp.eq.s32.totalorder %s32, 1
      %p459 = por %p457, %p458
      %p460 = scmp.ne.s32.totalorder %s451, %s452
      %p461 = scmp.eq.s32.totalorder %s32, 0
      %p462 = por %p460, %p461
      %p463 = scmp.ne.s32.totalorder %s451, %s452
      %p464 = scmp.eq.s32.totalorder %s33, 1
      %p465 = por %p463, %p464
      %p467 = scmp.ne.s32.totalorder %s452, %s466
      %p468 = scmp.eq.s32.totalorder %s33, 0
      %p469 = por %p467, %p468
      %p470 = scmp.le.s32.totalorder 1, %s27
      %p471 = scmp.lt.s32.totalorder %s27, 3
      %p472 = pnand %p470, %p471
      %p473 = pneg %p472
      // Predicated region
      $region9: #{_dc_call.1} parent=5 // pred_check
        _
      $region10: #{_dc_call.1} parent=5 // pred_check_branch
        %475 = sbr.rel (%p472) target = $region12
      $region11: #{_dc_call.1} parent=5 // pred_region
        %s476 = ssub.s32 %s27, 1
        // Predicated region
        $region13: #{_dc_call.1} parent=11 // pred_check
          %p477 = pneg %p48
        $region14: #{_dc_call.1} parent=11 // pred_check_branch
          %479 = sbr.rel (%p477) target = $region16
        $region15: #{_dc_call.1} parent=11 // pred_region
          _
        $region16: #{_dc_call.1} parent=11 // pred_fallthru
          _
        // Predicated region
        $region17: #{_dc_call.1} parent=11 // pred_check
          %p480 = pneg %p69
        $region18: #{_dc_call.1} parent=11 // pred_check_branch
          %482 = sbr.rel (%p480) target = $region20
        $region19: #{_dc_call.1} parent=11 // pred_region
          _
        $region20: #{_dc_call.1} parent=11 // pred_fallthru
          _
        // Predicated region
        $region21: #{_dc_call.1} parent=11 // pred_check
          %p483 = pneg %p90
        $region22: #{_dc_call.1} parent=11 // pred_check_branch
          %485 = sbr.rel (%p483) target = $region24
        $region23: #{_dc_call.1} parent=11 // pred_region
          _
        $region24: #{_dc_call.1} parent=11 // pred_fallthru
          _
        // Predicated region
        $region25: #{_dc_call.1} parent=11 // pred_check
          %p486 = pneg %p111
        $region26: #{_dc_call.1} parent=11 // pred_check_branch
          %488 = sbr.rel (%p486) target = $region28
        $region27: #{_dc_call.1} parent=11 // pred_region
          _
        $region28: #{_dc_call.1} parent=11 // pred_fallthru
          _
        // Predicated region
        $region29: #{_dc_call.1} parent=11 // pred_check
          %p489 = pneg %p210
        $region30: #{_dc_call.1} parent=11 // pred_check_branch
          %491 = sbr.rel (%p489) target = $region32
        $region31: #{_dc_call.1} parent=11 // pred_region
          _
        $region32: #{_dc_call.1} parent=11 // pred_fallthru
          _
        // Predicated region
        $region33: #{_dc_call.1} parent=11 // pred_check
          %p492 = pneg %p231
        $region34: #{_dc_call.1} parent=11 // pred_check_branch
          %494 = sbr.rel (%p492) target = $region36
        $region35: #{_dc_call.1} parent=11 // pred_region
          _
        $region36: #{_dc_call.1} parent=11 // pred_fallthru
          _
        // Predicated region
        $region37: #{_dc_call.1} parent=11 // pred_check
          %p495 = pneg %p252
        $region38: #{_dc_call.1} parent=11 // pred_check_branch
          %497 = sbr.rel (%p495) target = $region40
        $region39: #{_dc_call.1} parent=11 // pred_region
          _
        $region40: #{_dc_call.1} parent=11 // pred_fallthru
          _
        // Predicated region
        $region41: #{_dc_call.1} parent=11 // pred_check
          %p498 = pneg %p273
        $region42: #{_dc_call.1} parent=11 // pred_check_branch
          %500 = sbr.rel (%p498) target = $region44
        $region43: #{_dc_call.1} parent=11 // pred_region
          _
        $region44: #{_dc_call.1} parent=11 // pred_fallthru
          _
        // Predicated region
        $region45: #{_dc_call.1} parent=11 // pred_check
          %p501 = pneg %p294
        $region46: #{_dc_call.1} parent=11 // pred_check_branch
          %503 = sbr.rel (%p501) target = $region48
        $region47: #{_dc_call.1} parent=11 // pred_region
          _
        $region48: #{_dc_call.1} parent=11 // pred_fallthru
          _
        // Predicated region
        $region49: #{_dc_call.1} parent=11 // pred_check
          %p504 = pneg %p315
        $region50: #{_dc_call.1} parent=11 // pred_check_branch
          %506 = sbr.rel (%p504) target = $region52
        $region51: #{_dc_call.1} parent=11 // pred_region
          _
        $region52: #{_dc_call.1} parent=11 // pred_fallthru
          _
        // Predicated region
        $region53: #{_dc_call.1} parent=11 // pred_check
          %p507 = pneg %p336
        $region54: #{_dc_call.1} parent=11 // pred_check_branch
          %509 = sbr.rel (%p507) target = $region56
        $region55: #{_dc_call.1} parent=11 // pred_region
          _
        $region56: #{_dc_call.1} parent=11 // pred_fallthru
          _
        // Predicated region
        $region57: #{_dc_call.1} parent=11 // pred_check
          %p510 = pneg %p357
        $region58: #{_dc_call.1} parent=11 // pred_check_branch
          %512 = sbr.rel (%p510) target = $region60
        $region59: #{_dc_call.1} parent=11 // pred_region
          _
        $region60: #{_dc_call.1} parent=11 // pred_fallthru
          _
        // Predicated region
        $region61: #{_dc_call.1} parent=11 // pred_check
          %p513 = pneg %p378
        $region62: #{_dc_call.1} parent=11 // pred_check_branch
          %515 = sbr.rel (%p513) target = $region64
        $region63: #{_dc_call.1} parent=11 // pred_region
          _
        $region64: #{_dc_call.1} parent=11 // pred_fallthru
          _
        // Predicated region
        $region65: #{_dc_call.1} parent=11 // pred_check
          %p516 = pneg %p399
        $region66: #{_dc_call.1} parent=11 // pred_check_branch
          %518 = sbr.rel (%p516) target = $region68
        $region67: #{_dc_call.1} parent=11 // pred_region
          _
        $region68: #{_dc_call.1} parent=11 // pred_fallthru
          _
        // Predicated region
        $region69: #{_dc_call.1} parent=11 // pred_check
          %p519 = pneg %p420
        $region70: #{_dc_call.1} parent=11 // pred_check_branch
          %521 = sbr.rel (%p519) target = $region72
        $region71: #{_dc_call.1} parent=11 // pred_region
          _
        $region72: #{_dc_call.1} parent=11 // pred_fallthru
          _
      $region12: #{_dc_call.1} parent=5 // pred_fallthru
        _
      %p522 = scmp.lt.s32.totalorder %s27, 2
      // Predicated region
      $region73: #{_dc_call.1} parent=5 // pred_check
        %p523 = pneg %p522
      $region74: #{_dc_call.1} parent=5 // pred_check_branch
        %525 = sbr.rel (%p523) target = $region76
      $region75: #{_dc_call.1} parent=5 // pred_region
        // Predicated region
        $region77: #{_dc_call.1} parent=75 // pred_check
          %p526 = pneg %p131
        $region78: #{_dc_call.1} parent=75 // pred_check_branch
          %528 = sbr.rel (%p526) target = $region80
        $region79: #{_dc_call.1} parent=75 // pred_region
          %s529 = sand.u32 %s121, 1
          %s530 = sand.u32 %s121, 1
          %s531 = smul.addr %s530, 16
          %s532 = scalar_lea.vmem [#allocation5], %s531
          %s533 = smul.addr %s27, 8
          %s534 = scalar_lea.vmem %s4, %s533
          // Predicated region
          $region81: #{_dc_call.1} parent=79 // pred_check
            _
          $region82: #{_dc_call.1} parent=79 // pred_check_branch
            %536 = sbr.rel (0) target = $region84
          $region83: #{_dc_call.1} parent=79 // pred_region
            // Predicated region
            $region85: #{_dc_call.1} parent=83 // pred_check
              _
            $region86: #{_dc_call.1} parent=83 // pred_check_branch
              %538 = sbr.rel (0) target = $region88
            $region87: #{_dc_call.1} parent=83 // pred_region
              // Predicated region
              $region100: #{_dc_call.1} parent=87 // pred_check
                _
              $region101: #{_dc_call.1} parent=87 // pred_check_branch
                %556 = sbr.rel (0) target = $region103
              $region102: #{_dc_call.1} parent=87 // pred_region
                loop: start=0, step=1, limit=1
                $region104: #{_dc_call.1} parent=102 // loop_pre_header
                  _
                $region105: #{_dc_call.1} parent=102 // loop_header
                  %s558 = sphi 0, %s562
                  %p559 = scmp.ge.s32.totalorder %s558, 1
                  %s563 = sphi %s534, %s534
                  %s564 = sphi %s532, %s532
                $region106: #{_dc_call.1} parent=102 // loop_header_branch
                  %561 = sbr.rel (%p559) target = $region110
                $region107: #{_dc_call.1} parent=102 // loop_body
                  %v565 = vld [vmem:[%s563] sm:$0xff]
                  %566 = vst [vmem:[%s564] sm:$0xff] %v565
                  %v567 = vld [vmem:[%s563 + $0x10] sm:$0xff]
                  %568 = vst [vmem:[%s564 + $0x8] sm:$0xff] %v567
                $region108: #{_dc_call.1} parent=102 // loop_footer
                  %s562 = sadd.s32 1, %s558
                $region109: #{_dc_call.1} parent=102 // loop_footer_branch
                  %557 = sbr.rel target = $region105
                $region110: #{_dc_call.1} parent=102 // loop_exit
                  _
              $region103: #{_dc_call.1} parent=87 // pred_fallthru
                _
              // Predicated region
              $region111: #{_dc_call.1} parent=87 // pred_check
                _
              $region112: #{_dc_call.1} parent=87 // pred_check_branch
                %570 = sbr.rel target = $region114
              $region113: #{_dc_call.1} parent=87 // pred_region
                _
              $region114: #{_dc_call.1} parent=87 // pred_fallthru
                _
            $region88: #{_dc_call.1} parent=83 // pred_fallthru
              _
            // Predicated region
            $region89: #{_dc_call.1} parent=83 // pred_check
              _
            $region90: #{_dc_call.1} parent=83 // pred_check_branch
              %540 = sbr.rel target = $region92
            $region91: #{_dc_call.1} parent=83 // pred_region
              %s542 = ssub.s32 256, 1
              loop: start=0, step=1, limit=1
              $region93: #{_dc_call.1} parent=91 // loop_pre_header
                _
              $region94: #{_dc_call.1} parent=91 // loop_header
                %s544 = sphi 0, %s548
                %p545 = scmp.ge.s32.totalorder %s544, 1
                %s549 = sphi %s534, %s534
                %s550 = sphi %s532, %s532
              $region95: #{_dc_call.1} parent=91 // loop_header_branch
                %547 = sbr.rel (%p545) target = $region99
              $region96: #{_dc_call.1} parent=91 // loop_body
                %v551 = vld [vmem:[%s549] sm:%s542]
                %552 = vst [vmem:[%s550] sm:%s542] %v551
                %v553 = vld [vmem:[%s549 + $0x10] sm:%s542]
                %554 = vst [vmem:[%s550 + $0x8] sm:%s542] %v553
              $region97: #{_dc_call.1} parent=91 // loop_footer
                %s548 = sadd.s32 1, %s544
              $region98: #{_dc_call.1} parent=91 // loop_footer_branch
                %543 = sbr.rel target = $region94
              $region99: #{_dc_call.1} parent=91 // loop_exit
                _
            $region92: #{_dc_call.1} parent=83 // pred_fallthru
              _
          $region84: #{_dc_call.1} parent=79 // pred_fallthru
            _
          %571 = vnop
        $region80: #{_dc_call.1} parent=75 // pred_fallthru
          _
        // Predicated region
        $region115: #{_dc_call.1} parent=75 // pred_check
          %p572 = pneg %p157
        $region116: #{_dc_call.1} parent=75 // pred_check_branch
          %574 = sbr.rel (%p572) target = $region118
        $region117: #{_dc_call.1} parent=75 // pred_region
          %s575 = sand.u32 %s147, 1
          %s576 = sand.u32 %s147, 1
          %s577 = smul.addr %s576, 16
          %s578 = scalar_lea.vmem [#allocation6], %s577
          %s579 = smul.addr %s27, 8
          %s580 = scalar_lea.vmem %s5, %s579
          // Predicated region
          $region119: #{_dc_call.1} parent=117 // pred_check
            _
          $region120: #{_dc_call.1} parent=117 // pred_check_branch
            %582 = sbr.rel (0) target = $region122
          $region121: #{_dc_call.1} parent=117 // pred_region
            // Predicated region
            $region123: #{_dc_call.1} parent=121 // pred_check
              _
            $region124: #{_dc_call.1} parent=121 // pred_check_branch
              %584 = sbr.rel (0) target = $region126
            $region125: #{_dc_call.1} parent=121 // pred_region
              // Predicated region
              $region138: #{_dc_call.1} parent=125 // pred_check
                _
              $region139: #{_dc_call.1} parent=125 // pred_check_branch
                %602 = sbr.rel (0) target = $region141
              $region140: #{_dc_call.1} parent=125 // pred_region
                loop: start=0, step=1, limit=1
                $region142: #{_dc_call.1} parent=140 // loop_pre_header
                  _
                $region143: #{_dc_call.1} parent=140 // loop_header
                  %s604 = sphi 0, %s608
                  %p605 = scmp.ge.s32.totalorder %s604, 1
                  %s609 = sphi %s580, %s580
                  %s610 = sphi %s578, %s578
                $region144: #{_dc_call.1} parent=140 // loop_header_branch
                  %607 = sbr.rel (%p605) target = $region148
                $region145: #{_dc_call.1} parent=140 // loop_body
                  %v611 = vld [vmem:[%s609] sm:$0xff]
                  %612 = vst [vmem:[%s610] sm:$0xff] %v611
                  %v613 = vld [vmem:[%s609 + $0x10] sm:$0xff]
                  %614 = vst [vmem:[%s610 + $0x8] sm:$0xff] %v613
                $region146: #{_dc_call.1} parent=140 // loop_footer
                  %s608 = sadd.s32 1, %s604
                $region147: #{_dc_call.1} parent=140 // loop_footer_branch
                  %603 = sbr.rel target = $region143
                $region148: #{_dc_call.1} parent=140 // loop_exit
                  _
              $region141: #{_dc_call.1} parent=125 // pred_fallthru
                _
              // Predicated region
              $region149: #{_dc_call.1} parent=125 // pred_check
                _
              $region150: #{_dc_call.1} parent=125 // pred_check_branch
                %616 = sbr.rel target = $region152
              $region151: #{_dc_call.1} parent=125 // pred_region
                _
              $region152: #{_dc_call.1} parent=125 // pred_fallthru
                _
            $region126: #{_dc_call.1} parent=121 // pred_fallthru
              _
            // Predicated region
            $region127: #{_dc_call.1} parent=121 // pred_check
              _
            $region128: #{_dc_call.1} parent=121 // pred_check_branch
              %586 = sbr.rel target = $region130
            $region129: #{_dc_call.1} parent=121 // pred_region
              %s588 = ssub.s32 256, 1
              loop: start=0, step=1, limit=1
              $region131: #{_dc_call.1} parent=129 // loop_pre_header
                _
              $region132: #{_dc_call.1} parent=129 // loop_header
                %s590 = sphi 0, %s594
                %p591 = scmp.ge.s32.totalorder %s590, 1
                %s595 = sphi %s580, %s580
                %s596 = sphi %s578, %s578
              $region133: #{_dc_call.1} parent=129 // loop_header_branch
                %593 = sbr.rel (%p591) target = $region137
              $region134: #{_dc_call.1} parent=129 // loop_body
                %v597 = vld [vmem:[%s595] sm:%s588]
                %598 = vst [vmem:[%s596] sm:%s588] %v597
                %v599 = vld [vmem:[%s595 + $0x10] sm:%s588]
                %600 = vst [vmem:[%s596 + $0x8] sm:%s588] %v599
              $region135: #{_dc_call.1} parent=129 // loop_footer
                %s594 = sadd.s32 1, %s590
              $region136: #{_dc_call.1} parent=129 // loop_footer_branch
                %589 = sbr.rel target = $region132
              $region137: #{_dc_call.1} parent=129 // loop_exit
                _
            $region130: #{_dc_call.1} parent=121 // pred_fallthru
              _
          $region122: #{_dc_call.1} parent=117 // pred_fallthru
            _
          %617 = vnop
        $region118: #{_dc_call.1} parent=75 // pred_fallthru
          _
        // Predicated region
        $region153: #{_dc_call.1} parent=75 // pred_check
          %p618 = pneg %p183
        $region154: #{_dc_call.1} parent=75 // pred_check_branch
          %620 = sbr.rel (%p618) target = $region156
        $region155: #{_dc_call.1} parent=75 // pred_region
          %s621 = sand.u32 %s173, 1
          %s622 = sand.u32 %s173, 1
          %s623 = smul.addr %s622, 16
          %s624 = scalar_lea.vmem [#allocation7], %s623
          %s625 = smul.addr %s27, 8
          %s626 = scalar_lea.vmem %s6, %s625
          // Predicated region
          $region157: #{_dc_call.1} parent=155 // pred_check
            _
          $region158: #{_dc_call.1} parent=155 // pred_check_branch
            %628 = sbr.rel (0) target = $region160
          $region159: #{_dc_call.1} parent=155 // pred_region
            // Predicated region
            $region161: #{_dc_call.1} parent=159 // pred_check
              _
            $region162: #{_dc_call.1} parent=159 // pred_check_branch
              %630 = sbr.rel (0) target = $region164
            $region163: #{_dc_call.1} parent=159 // pred_region
              // Predicated region
              $region176: #{_dc_call.1} parent=163 // pred_check
                _
              $region177: #{_dc_call.1} parent=163 // pred_check_branch
                %648 = sbr.rel (0) target = $region179
              $region178: #{_dc_call.1} parent=163 // pred_region
                loop: start=0, step=1, limit=1
                $region180: #{_dc_call.1} parent=178 // loop_pre_header
                  _
                $region181: #{_dc_call.1} parent=178 // loop_header
                  %s650 = sphi 0, %s654
                  %p651 = scmp.ge.s32.totalorder %s650, 1
                  %s655 = sphi %s626, %s626
                  %s656 = sphi %s624, %s624
                $region182: #{_dc_call.1} parent=178 // loop_header_branch
                  %653 = sbr.rel (%p651) target = $region186
                $region183: #{_dc_call.1} parent=178 // loop_body
                  %v657 = vld [vmem:[%s655] sm:$0xff]
                  %658 = vst [vmem:[%s656] sm:$0xff] %v657
                  %v659 = vld [vmem:[%s655 + $0x10] sm:$0xff]
                  %660 = vst [vmem:[%s656 + $0x8] sm:$0xff] %v659
                $region184: #{_dc_call.1} parent=178 // loop_footer
                  %s654 = sadd.s32 1, %s650
                $region185: #{_dc_call.1} parent=178 // loop_footer_branch
                  %649 = sbr.rel target = $region181
                $region186: #{_dc_call.1} parent=178 // loop_exit
                  _
              $region179: #{_dc_call.1} parent=163 // pred_fallthru
                _
              // Predicated region
              $region187: #{_dc_call.1} parent=163 // pred_check
                _
              $region188: #{_dc_call.1} parent=163 // pred_check_branch
                %662 = sbr.rel target = $region190
              $region189: #{_dc_call.1} parent=163 // pred_region
                _
              $region190: #{_dc_call.1} parent=163 // pred_fallthru
                _
            $region164: #{_dc_call.1} parent=159 // pred_fallthru
              _
            // Predicated region
            $region165: #{_dc_call.1} parent=159 // pred_check
              _
            $region166: #{_dc_call.1} parent=159 // pred_check_branch
              %632 = sbr.rel target = $region168
            $region167: #{_dc_call.1} parent=159 // pred_region
              %s634 = ssub.s32 256, 1
              loop: start=0, step=1, limit=1
              $region169: #{_dc_call.1} parent=167 // loop_pre_header
                _
              $region170: #{_dc_call.1} parent=167 // loop_header
                %s636 = sphi 0, %s640
                %p637 = scmp.ge.s32.totalorder %s636, 1
                %s641 = sphi %s626, %s626
                %s642 = sphi %s624, %s624
              $region171: #{_dc_call.1} parent=167 // loop_header_branch
                %639 = sbr.rel (%p637) target = $region175
              $region172: #{_dc_call.1} parent=167 // loop_body
                %v643 = vld [vmem:[%s641] sm:%s634]
                %644 = vst [vmem:[%s642] sm:%s634] %v643
                %v645 = vld [vmem:[%s641 + $0x10] sm:%s634]
                %646 = vst [vmem:[%s642 + $0x8] sm:%s634] %v645
              $region173: #{_dc_call.1} parent=167 // loop_footer
                %s640 = sadd.s32 1, %s636
              $region174: #{_dc_call.1} parent=167 // loop_footer_branch
                %635 = sbr.rel target = $region170
              $region175: #{_dc_call.1} parent=167 // loop_exit
                _
            $region168: #{_dc_call.1} parent=159 // pred_fallthru
              _
          $region160: #{_dc_call.1} parent=155 // pred_fallthru
            _
          %663 = vnop
        $region156: #{_dc_call.1} parent=75 // pred_fallthru
          _
      $region76: #{_dc_call.1} parent=5 // pred_fallthru
        _
      %p664 = scmp.le.s32.totalorder 1, %s27
      %p665 = scmp.lt.s32.totalorder %s27, 3
      %p666 = pnand %p664, %p665
      %p667 = pneg %p666
      // Predicated region
      $region191: #{_dc_call.1} parent=5 // pred_check
        _
      $region192: #{_dc_call.1} parent=5 // pred_check_branch
        %669 = sbr.rel (%p666) target = $region194
      $region193: #{_dc_call.1} parent=5 // pred_region
        %s670 = ssub.s32 %s27, 1
        %s671 = sand.u32 %s124, 1
        %s672 = sand.u32 %s124, 1
        %s673 = smul.addr %s672, 16
        %s674 = scalar_lea.vmem [#allocation5], %s673
        // Predicated region
        $region195: #{_dc_call.1} parent=193 // pred_check
          %p675 = pneg %p137
        $region196: #{_dc_call.1} parent=193 // pred_check_branch
          %677 = sbr.rel (%p675) target = $region198
        $region197: #{_dc_call.1} parent=193 // pred_region
          _
        $region198: #{_dc_call.1} parent=193 // pred_fallthru
          _
        %s678 = sand.u32 %s150, 1
        %s679 = sand.u32 %s150, 1
        %s680 = smul.addr %s679, 16
        %s681 = scalar_lea.vmem [#allocation6], %s680
        // Predicated region
        $region199: #{_dc_call.1} parent=193 // pred_check
          %p682 = pneg %p163
        $region200: #{_dc_call.1} parent=193 // pred_check_branch
          %684 = sbr.rel (%p682) target = $region202
        $region201: #{_dc_call.1} parent=193 // pred_region
          _
        $region202: #{_dc_call.1} parent=193 // pred_fallthru
          _
        %s685 = sand.u32 %s176, 1
        %s686 = sand.u32 %s176, 1
        %s687 = smul.addr %s686, 16
        %s688 = scalar_lea.vmem [#allocation7], %s687
        // Predicated region
        $region203: #{_dc_call.1} parent=193 // pred_check
          %p689 = pneg %p189
        $region204: #{_dc_call.1} parent=193 // pred_check_branch
          %691 = sbr.rel (%p689) target = $region206
        $region205: #{_dc_call.1} parent=193 // pred_region
          _
        $region206: #{_dc_call.1} parent=193 // pred_fallthru
          _
        %p692 = pneg %p48
        %p693 = pneg %p45
        %p694 = pneg %p69
        %p695 = pneg %p66
        %p696 = pneg %p90
        %p697 = pneg %p87
        %p698 = pneg %p111
        %p699 = pneg %p108
        %s700 = sand.u32 %s124, 1
        %s701 = sand.u32 %s124, 1
        %s702 = smul.addr %s701, 16
        %s703 = scalar_lea.vmem [#allocation5], %s702
        %p704 = pneg %p137
        %p705 = pneg %p134
        %s706 = sand.u32 %s150, 1
        %s707 = sand.u32 %s150, 1
        %s708 = smul.addr %s707, 16
        %s709 = scalar_lea.vmem [#allocation6], %s708
        %p710 = pneg %p163
        %p711 = pneg %p160
        %s712 = sand.u32 %s176, 1
        %s713 = sand.u32 %s176, 1
        %s714 = smul.addr %s713, 16
        %s715 = scalar_lea.vmem [#allocation7], %s714
        %p716 = pneg %p189
        %p717 = pneg %p186
        %p718 = pneg %p210
        %p719 = pneg %p207
        %p720 = pneg %p231
        %p721 = pneg %p228
        %p722 = pneg %p252
        %p723 = pneg %p249
        %p724 = pneg %p273
        %p725 = pneg %p270
        %p726 = pneg %p294
        %p727 = pneg %p291
        %p728 = pneg %p315
        %p729 = pneg %p312
        %p730 = pneg %p336
        %p731 = pneg %p333
        %p732 = pneg %p357
        %p733 = pneg %p354
        %p734 = pneg %p378
        %p735 = pneg %p375
        %p736 = pneg %p399
        %p737 = pneg %p396
        %p738 = pneg %p420
        %p739 = pneg %p417
        %p740 = pneg %p441
        %p741 = pneg %p438
        %p742 = pneg %p462
        %p743 = pneg %p459
        %p744 = scmp.eq.s32.totalorder %s32, 0
        // Predicated region
        $region207: #{_dc_call.1} parent=193 // pred_check
          %p745 = pneg %p744
        $region208: #{_dc_call.1} parent=193 // pred_check_branch
          %747 = sbr.rel (%p745) target = $region210
        $region209: #{_dc_call.1} parent=193 // pred_region
          %vm748 = vcmask 130048
          %749 = vst.msk [vmem:[#allocation2] sm:$0xff] %vm748, 0.0
          %750 = vst.msk [vmem:[#allocation2 + $0x8] sm:$0xff] %vm748, 0.0
          %751 = vst.msk [vmem:[#allocation3] sm:$0xff] %vm748, 0.0
          %752 = vst.msk [vmem:[#allocation3 + $0x8] sm:$0xff] %vm748, 0.0
        $region210: #{_dc_call.1} parent=193 // pred_fallthru
          _
        %v753 = vld [vmem:[%s0] sm:$0xff]
        %v754 = vld [vmem:[%s0 + $0x8] sm:$0xff]
        %v755 = vld [vmem:[%s1] sm:$0xff]
        %v756 = vld [vmem:[%s1 + $0x8] sm:$0xff]
        %v757 = vld [vmem:[%s15] sm:$0xff]
        %v758 = vld [vmem:[%s15 + $0x8] sm:$0xff]
        %vm759 = vcmask 130048
        %v761 = vsel %vm759, %v753, 0
        %v764 = vsel %vm759, %v754, 0
        %766 = vmatprep.subr.mxu0 0.0
        %767 = vmatpush1.msra.mxu0 0.0
        %768 = vmatprep.subr.mxu0 0.0
        %769 = vmatpush1.msra.mxu0 0.0
        %770 = vmatprep.subr.mxu0 0.0
        %771 = vmatpush1.msra.mxu0 0.0
        %772 = vmatprep.subr.mxu0 0.0
        %773 = vmatpush1.msra.mxu0 0.0
        %774 = vmatprep.subr.mxu0 0.0
        %775 = vmatpush1.msra.mxu0 0.0
        %776 = vmatprep.subr.mxu0 0.0
        %777 = vmatpush1.msra.mxu0 0.0
        %778 = vmatprep.subr.mxu0 0.0
        %779 = vmatpush1.msra.mxu0 0.0
        %780 = vmatprep.subr.mxu0 0.0
        %781 = vmatpush1.msra.mxu0 0.0
        %782 = vmatprep.subr.mxu0 0.0
        %783 = vmatpush1.msra.mxu0 0.0
        %784 = vmatprep.subr.mxu0 0.0
        %785 = vmatpush1.msra.mxu0 0.0
        %786 = vmatprep.subr.mxu0 0.0
        %787 = vmatpush1.msra.mxu0 0.0
        %788 = vmatprep.subr.mxu0 0.0
        %789 = vmatpush1.msra.mxu0 0.0
        %790 = vmatprep.subr.mxu0 0.0
        %791 = vmatpush1.msra.mxu0 0.0
        %792 = vmatprep.subr.mxu0 0.0
        %793 = vmatpush1.msra.mxu0 0.0
        %794 = vmatprep.subr.mxu0 0.0
        %795 = vmatpush1.msra.mxu0 %v758
        %796 = vmatprep.subr.mxu0 0.0
        %797 = vmatpush1.msra.mxu0 %v757
        %798 = vmatprep.subr.mxu0 0.0
        %799 = vmatpush2.msra.mxu0 0.0
        %800 = vmatprep.subr.mxu0 0.0
        %801 = vmatpush2.msra.mxu0 0.0
        %802 = vmatprep.subr.mxu0 0.0
        %803 = vmatpush2.msra.mxu0 0.0
        %804 = vmatprep.subr.mxu0 0.0
        %805 = vmatpush2.msra.mxu0 0.0
        %806 = vmatprep.subr.mxu0 0.0
        %807 = vmatpush2.msra.mxu0 0.0
        %808 = vmatprep.subr.mxu0 0.0
        %809 = vmatpush2.msra.mxu0 0.0
        %810 = vmatprep.subr.mxu0 0.0
        %811 = vmatpush2.msra.mxu0 0.0
        %812 = vmatprep.subr.mxu0 0.0
        %813 = vmatpush2.msra.mxu0 0.0
        %814 = vmatprep.subr.mxu0 0.0
        %815 = vmatpush2.msra.mxu0 0.0
        %816 = vmatprep.subr.mxu0 0.0
        %817 = vmatpush2.msra.mxu0 0.0
        %818 = vmatprep.subr.mxu0 0.0
        %819 = vmatpush2.msra.mxu0 0.0
        %820 = vmatprep.subr.mxu0 0.0
        %821 = vmatpush2.msra.mxu0 0.0
        %822 = vmatprep.subr.mxu0 0.0
        %823 = vmatpush2.msra.mxu0 0.0
        %824 = vmatprep.subr.mxu0 0.0
        %825 = vmatpush2.msra.mxu0 0.0
        %826 = vmatprep.subr.mxu0 0.0
        %827 = vmatpush2.msra.mxu0 0.0
        %828 = vmatprep.subr.mxu0 0.0
        %829 = vmatpush2.msra.mxu0 0.0
        %830 = vmatprep.mubr.f32.mxu0 0.0
        %831 = vmatmul.mubr.f32.gmra.mxu0 %v761
        %v832 = vpop.f32.mrf.mxu0
        %v833 = vadd.f32 0.0, %v832
        %v834 = vpop.f32.mrf.mxu0
        %835 = vmatprep.mubr.f32.mxu0 0.0
        %836 = vmatmul.mubr.f32.gmra.mxu0 %v764
        %v837 = vpop.f32.mrf.mxu0
        %v838 = vadd.f32 0.0, %v837
        %v839 = vpop.f32.mrf.mxu0
        %840 = vdwg.mxu0
        %v842 = vsel %vm759, %v755, 0
        %v845 = vsel %vm759, %v756, 0
        %847 = vmatprep.subr.mxu0 0.0
        %848 = vmatpush1.msra.mxu0 0.0
        %849 = vmatprep.subr.mxu0 0.0
        %850 = vmatpush1.msra.mxu0 0.0
        %851 = vmatprep.subr.mxu0 0.0
        %852 = vmatpush1.msra.mxu0 0.0
        %853 = vmatprep.subr.mxu0 0.0
        %854 = vmatpush1.msra.mxu0 0.0
        %855 = vmatprep.subr.mxu0 0.0
        %856 = vmatpush1.msra.mxu0 0.0
        %857 = vmatprep.subr.mxu0 0.0
        %858 = vmatpush1.msra.mxu0 0.0
        %859 = vmatprep.subr.mxu0 0.0
        %860 = vmatpush1.msra.mxu0 0.0
        %861 = vmatprep.subr.mxu0 0.0
        %862 = vmatpush1.msra.mxu0 0.0
        %863 = vmatprep.subr.mxu0 0.0
        %864 = vmatpush1.msra.mxu0 0.0
        %865 = vmatprep.subr.mxu0 0.0
        %866 = vmatpush1.msra.mxu0 0.0
        %867 = vmatprep.subr.mxu0 0.0
        %868 = vmatpush1.msra.mxu0 0.0
        %869 = vmatprep.subr.mxu0 0.0
        %870 = vmatpush1.msra.mxu0 0.0
        %871 = vmatprep.subr.mxu0 0.0
        %872 = vmatpush1.msra.mxu0 0.0
        %873 = vmatprep.subr.mxu0 0.0
        %874 = vmatpush1.msra.mxu0 0.0
        %875 = vmatprep.subr.mxu0 0.0
        %876 = vmatpush1.msra.mxu0 %v758
        %877 = vmatprep.subr.mxu0 0.0
        %878 = vmatpush1.msra.mxu0 %v757
        %879 = vmatprep.subr.mxu0 0.0
        %880 = vmatpush2.msra.mxu0 0.0
        %881 = vmatprep.subr.mxu0 0.0
        %882 = vmatpush2.msra.mxu0 0.0
        %883 = vmatprep.subr.mxu0 0.0
        %884 = vmatpush2.msra.mxu0 0.0
        %885 = vmatprep.subr.mxu0 0.0
        %886 = vmatpush2.msra.mxu0 0.0
        %887 = vmatprep.subr.mxu0 0.0
        %888 = vmatpush2.msra.mxu0 0.0
        %889 = vmatprep.subr.mxu0 0.0
        %890 = vmatpush2.msra.mxu0 0.0
        %891 = vmatprep.subr.mxu0 0.0
        %892 = vmatpush2.msra.mxu0 0.0
        %893 = vmatprep.subr.mxu0 0.0
        %894 = vmatpush2.msra.mxu0 0.0
        %895 = vmatprep.subr.mxu0 0.0
        %896 = vmatpush2.msra.mxu0 0.0
        %897 = vmatprep.subr.mxu0 0.0
        %898 = vmatpush2.msra.mxu0 0.0
        %899 = vmatprep.subr.mxu0 0.0
        %900 = vmatpush2.msra.mxu0 0.0
        %901 = vmatprep.subr.mxu0 0.0
        %902 = vmatpush2.msra.mxu0 0.0
        %903 = vmatprep.subr.mxu0 0.0
        %904 = vmatpush2.msra.mxu0 0.0
        %905 = vmatprep.subr.mxu0 0.0
        %906 = vmatpush2.msra.mxu0 0.0
        %907 = vmatprep.subr.mxu0 0.0
        %908 = vmatpush2.msra.mxu0 0.0
        %909 = vmatprep.subr.mxu0 0.0
        %910 = vmatpush2.msra.mxu0 0.0
        %911 = vmatprep.mubr.f32.mxu0 0.0
        %912 = vmatmul.mubr.f32.gmra.mxu0 %v842
        %v913 = vpop.f32.mrf.mxu0
        %v914 = vadd.f32 0.0, %v913
        %v915 = vpop.f32.mrf.mxu0
        %916 = vmatprep.mubr.f32.mxu0 0.0
        %917 = vmatmul.mubr.f32.gmra.mxu0 %v845
        %v918 = vpop.f32.mrf.mxu0
        %v919 = vadd.f32 0.0, %v918
        %v920 = vpop.f32.mrf.mxu0
        %921 = vdwg.mxu0
        %v922 = vld [vmem:[%s674] sm:$0xff]
        %v923 = vld [vmem:[%s674 + $0x8] sm:$0xff]
        %v924 = vld [vmem:[%s681] sm:$0xff]
        %v925 = vld [vmem:[%s681 + $0x8] sm:$0xff]
        %v926 = vld [vmem:[%s688] sm:$0xff]
        %v927 = vld [vmem:[%s688 + $0x8] sm:$0xff]
        %v928 = vmul.f32 %v922, %v833
        %v929 = vmul.f32 %v923, %v838
        %v930 = vmul.f32 %v924, %v914
        %v931 = vmul.f32 %v925, %v919
        %v932 = vsub.f32 %v928, %v930
        %v933 = vsub.f32 %v929, %v931
        %v934 = vmul.f32 %v922, %v914
        %v935 = vmul.f32 %v923, %v919
        %v936 = vmul.f32 %v924, %v833
        %v937 = vmul.f32 %v925, %v838
        %v938 = vadd.f32 %v934, %v936
        %v939 = vadd.f32 %v935, %v937
        %v940 = vld [vmem:[%s7] sm:$0xff]
        %v941 = vld [vmem:[%s7 + $0x8] sm:$0xff]
        %v942 = vld [vmem:[%s8] sm:$0xff]
        %v943 = vld [vmem:[%s8 + $0x8] sm:$0xff]
        %v945 = vsel %vm759, %v940, 0
        %v948 = vsel %vm759, %v941, 0
        %950 = vmatprep.subr.mxu0 0.0
        %951 = vmatpush1.msra.mxu0 0.0
        %952 = vmatprep.subr.mxu0 0.0
        %953 = vmatpush1.msra.mxu0 0.0
        %954 = vmatprep.subr.mxu0 0.0
        %955 = vmatpush1.msra.mxu0 0.0
        %956 = vmatprep.subr.mxu0 0.0
        %957 = vmatpush1.msra.mxu0 0.0
        %958 = vmatprep.subr.mxu0 0.0
        %959 = vmatpush1.msra.mxu0 0.0
        %960 = vmatprep.subr.mxu0 0.0
        %961 = vmatpush1.msra.mxu0 0.0
        %962 = vmatprep.subr.mxu0 0.0
        %963 = vmatpush1.msra.mxu0 0.0
        %964 = vmatprep.subr.mxu0 0.0
        %965 = vmatpush1.msra.mxu0 0.0
        %966 = vmatprep.subr.mxu0 0.0
        %967 = vmatpush1.msra.mxu0 0.0
        %968 = vmatprep.subr.mxu0 0.0
        %969 = vmatpush1.msra.mxu0 0.0
        %970 = vmatprep.subr.mxu0 0.0
        %971 = vmatpush1.msra.mxu0 0.0
        %972 = vmatprep.subr.mxu0 0.0
        %973 = vmatpush1.msra.mxu0 0.0
        %974 = vmatprep.subr.mxu0 0.0
        %975 = vmatpush1.msra.mxu0 0.0
        %976 = vmatprep.subr.mxu0 0.0
        %977 = vmatpush1.msra.mxu0 0.0
        %978 = vmatprep.subr.mxu0 0.0
        %979 = vmatpush1.msra.mxu0 %v933
        %980 = vmatprep.subr.mxu0 0.0
        %981 = vmatpush1.msra.mxu0 %v932
        %982 = vmatprep.subr.mxu0 0.0
        %983 = vmatpush2.msra.mxu0 0.0
        %984 = vmatprep.subr.mxu0 0.0
        %985 = vmatpush2.msra.mxu0 0.0
        %986 = vmatprep.subr.mxu0 0.0
        %987 = vmatpush2.msra.mxu0 0.0
        %988 = vmatprep.subr.mxu0 0.0
        %989 = vmatpush2.msra.mxu0 0.0
        %990 = vmatprep.subr.mxu0 0.0
        %991 = vmatpush2.msra.mxu0 0.0
        %992 = vmatprep.subr.mxu0 0.0
        %993 = vmatpush2.msra.mxu0 0.0
        %994 = vmatprep.subr.mxu0 0.0
        %995 = vmatpush2.msra.mxu0 0.0
        %996 = vmatprep.subr.mxu0 0.0
        %997 = vmatpush2.msra.mxu0 0.0
        %998 = vmatprep.subr.mxu0 0.0
        %999 = vmatpush2.msra.mxu0 0.0
        %1000 = vmatprep.subr.mxu0 0.0
        %1001 = vmatpush2.msra.mxu0 0.0
        %1002 = vmatprep.subr.mxu0 0.0
        %1003 = vmatpush2.msra.mxu0 0.0
        %1004 = vmatprep.subr.mxu0 0.0
        %1005 = vmatpush2.msra.mxu0 0.0
        %1006 = vmatprep.subr.mxu0 0.0
        %1007 = vmatpush2.msra.mxu0 0.0
        %1008 = vmatprep.subr.mxu0 0.0
        %1009 = vmatpush2.msra.mxu0 0.0
        %1010 = vmatprep.subr.mxu0 0.0
        %1011 = vmatpush2.msra.mxu0 0.0
        %1012 = vmatprep.subr.mxu0 0.0
        %1013 = vmatpush2.msra.mxu0 0.0
        %1014 = vmatprep.mubr.f32.mxu0 0.0
        %1015 = vmatmul.mubr.f32.gmra.mxu0 %v945
        %v1016 = vpop.f32.mrf.mxu0
        %v1017 = vadd.f32 0.0, %v1016
        %v1018 = vpop.f32.mrf.mxu0
        %1019 = vmatprep.mubr.f32.mxu0 0.0
        %1020 = vmatmul.mubr.f32.gmra.mxu0 %v948
        %v1021 = vpop.f32.mrf.mxu0
        %v1022 = vadd.f32 0.0, %v1021
        %v1023 = vpop.f32.mrf.mxu0
        %1024 = vdwg.mxu0
        %v1026 = vsel %vm759, %v942, 0
        %v1029 = vsel %vm759, %v943, 0
        %1031 = vmatprep.subr.mxu0 0.0
        %1032 = vmatpush1.msra.mxu0 0.0
        %1033 = vmatprep.subr.mxu0 0.0
        %1034 = vmatpush1.msra.mxu0 0.0
        %1035 = vmatprep.subr.mxu0 0.0
        %1036 = vmatpush1.msra.mxu0 0.0
        %1037 = vmatprep.subr.mxu0 0.0
        %1038 = vmatpush1.msra.mxu0 0.0
        %1039 = vmatprep.subr.mxu0 0.0
        %1040 = vmatpush1.msra.mxu0 0.0
        %1041 = vmatprep.subr.mxu0 0.0
        %1042 = vmatpush1.msra.mxu0 0.0
        %1043 = vmatprep.subr.mxu0 0.0
        %1044 = vmatpush1.msra.mxu0 0.0
        %1045 = vmatprep.subr.mxu0 0.0
        %1046 = vmatpush1.msra.mxu0 0.0
        %1047 = vmatprep.subr.mxu0 0.0
        %1048 = vmatpush1.msra.mxu0 0.0
        %1049 = vmatprep.subr.mxu0 0.0
        %1050 = vmatpush1.msra.mxu0 0.0
        %1051 = vmatprep.subr.mxu0 0.0
        %1052 = vmatpush1.msra.mxu0 0.0
        %1053 = vmatprep.subr.mxu0 0.0
        %1054 = vmatpush1.msra.mxu0 0.0
        %1055 = vmatprep.subr.mxu0 0.0
        %1056 = vmatpush1.msra.mxu0 0.0
        %1057 = vmatprep.subr.mxu0 0.0
        %1058 = vmatpush1.msra.mxu0 0.0
        %1059 = vmatprep.subr.mxu0 0.0
        %1060 = vmatpush1.msra.mxu0 %v939
        %1061 = vmatprep.subr.mxu0 0.0
        %1062 = vmatpush1.msra.mxu0 %v938
        %1063 = vmatprep.subr.mxu0 0.0
        %1064 = vmatpush2.msra.mxu0 0.0
        %1065 = vmatprep.subr.mxu0 0.0
        %1066 = vmatpush2.msra.mxu0 0.0
        %1067 = vmatprep.subr.mxu0 0.0
        %1068 = vmatpush2.msra.mxu0 0.0
        %1069 = vmatprep.subr.mxu0 0.0
        %1070 = vmatpush2.msra.mxu0 0.0
        %1071 = vmatprep.subr.mxu0 0.0
        %1072 = vmatpush2.msra.mxu0 0.0
        %1073 = vmatprep.subr.mxu0 0.0
        %1074 = vmatpush2.msra.mxu0 0.0
        %1075 = vmatprep.subr.mxu0 0.0
        %1076 = vmatpush2.msra.mxu0 0.0
        %1077 = vmatprep.subr.mxu0 0.0
        %1078 = vmatpush2.msra.mxu0 0.0
        %1079 = vmatprep.subr.mxu0 0.0
        %1080 = vmatpush2.msra.mxu0 0.0
        %1081 = vmatprep.subr.mxu0 0.0
        %1082 = vmatpush2.msra.mxu0 0.0
        %1083 = vmatprep.subr.mxu0 0.0
        %1084 = vmatpush2.msra.mxu0 0.0
        %1085 = vmatprep.subr.mxu0 0.0
        %1086 = vmatpush2.msra.mxu0 0.0
        %1087 = vmatprep.subr.mxu0 0.0
        %1088 = vmatpush2.msra.mxu0 0.0
        %1089 = vmatprep.subr.mxu0 0.0
        %1090 = vmatpush2.msra.mxu0 0.0
        %1091 = vmatprep.subr.mxu0 0.0
        %1092 = vmatpush2.msra.mxu0 0.0
        %1093 = vmatprep.subr.mxu0 0.0
        %1094 = vmatpush2.msra.mxu0 0.0
        %1095 = vmatprep.mubr.f32.mxu0 0.0
        %1096 = vmatmul.mubr.f32.gmra.mxu0 %v1026
        %v1097 = vpop.f32.mrf.mxu0
        %v1098 = vadd.f32 0.0, %v1097
        %v1099 = vpop.f32.mrf.mxu0
        %1100 = vmatprep.mubr.f32.mxu0 0.0
        %1101 = vmatmul.mubr.f32.gmra.mxu0 %v1029
        %v1102 = vpop.f32.mrf.mxu0
        %v1103 = vadd.f32 0.0, %v1102
        %v1104 = vpop.f32.mrf.mxu0
        %1105 = vdwg.mxu0
        %v1106 = vadd.f32 %v940, %v942
        %v1107 = vadd.f32 %v941, %v943
        %v1108 = vadd.f32 %v932, %v938
        %v1109 = vadd.f32 %v933, %v939
        %v1111 = vsel %vm759, %v1106, 0
        %v1114 = vsel %vm759, %v1107, 0
        %1116 = vmatprep.subr.mxu0 0.0
        %1117 = vmatpush1.msra.mxu0 0.0
        %1118 = vmatprep.subr.mxu0 0.0
        %1119 = vmatpush1.msra.mxu0 0.0
        %1120 = vmatprep.subr.mxu0 0.0
        %1121 = vmatpush1.msra.mxu0 0.0
        %1122 = vmatprep.subr.mxu0 0.0
        %1123 = vmatpush1.msra.mxu0 0.0
        %1124 = vmatprep.subr.mxu0 0.0
        %1125 = vmatpush1.msra.mxu0 0.0
        %1126 = vmatprep.subr.mxu0 0.0
        %1127 = vmatpush1.msra.mxu0 0.0
        %1128 = vmatprep.subr.mxu0 0.0
        %1129 = vmatpush1.msra.mxu0 0.0
        %1130 = vmatprep.subr.mxu0 0.0
        %1131 = vmatpush1.msra.mxu0 0.0
        %1132 = vmatprep.subr.mxu0 0.0
        %1133 = vmatpush1.msra.mxu0 0.0
        %1134 = vmatprep.subr.mxu0 0.0
        %1135 = vmatpush1.msra.mxu0 0.0
        %1136 = vmatprep.subr.mxu0 0.0
        %1137 = vmatpush1.msra.mxu0 0.0
        %1138 = vmatprep.subr.mxu0 0.0
        %1139 = vmatpush1.msra.mxu0 0.0
        %1140 = vmatprep.subr.mxu0 0.0
        %1141 = vmatpush1.msra.mxu0 0.0
        %1142 = vmatprep.subr.mxu0 0.0
        %1143 = vmatpush1.msra.mxu0 0.0
        %1144 = vmatprep.subr.mxu0 0.0
        %1145 = vmatpush1.msra.mxu0 %v1109
        %1146 = vmatprep.subr.mxu0 0.0
        %1147 = vmatpush1.msra.mxu0 %v1108
        %1148 = vmatprep.subr.mxu0 0.0
        %1149 = vmatpush2.msra.mxu0 0.0
        %1150 = vmatprep.subr.mxu0 0.0
        %1151 = vmatpush2.msra.mxu0 0.0
        %1152 = vmatprep.subr.mxu0 0.0
        %1153 = vmatpush2.msra.mxu0 0.0
        %1154 = vmatprep.subr.mxu0 0.0
        %1155 = vmatpush2.msra.mxu0 0.0
        %1156 = vmatprep.subr.mxu0 0.0
        %1157 = vmatpush2.msra.mxu0 0.0
        %1158 = vmatprep.subr.mxu0 0.0
        %1159 = vmatpush2.msra.mxu0 0.0
        %1160 = vmatprep.subr.mxu0 0.0
        %1161 = vmatpush2.msra.mxu0 0.0
        %1162 = vmatprep.subr.mxu0 0.0
        %1163 = vmatpush2.msra.mxu0 0.0
        %1164 = vmatprep.subr.mxu0 0.0
        %1165 = vmatpush2.msra.mxu0 0.0
        %1166 = vmatprep.subr.mxu0 0.0
        %1167 = vmatpush2.msra.mxu0 0.0
        %1168 = vmatprep.subr.mxu0 0.0
        %1169 = vmatpush2.msra.mxu0 0.0
        %1170 = vmatprep.subr.mxu0 0.0
        %1171 = vmatpush2.msra.mxu0 0.0
        %1172 = vmatprep.subr.mxu0 0.0
        %1173 = vmatpush2.msra.mxu0 0.0
        %1174 = vmatprep.subr.mxu0 0.0
        %1175 = vmatpush2.msra.mxu0 0.0
        %1176 = vmatprep.subr.mxu0 0.0
        %1177 = vmatpush2.msra.mxu0 0.0
        %1178 = vmatprep.subr.mxu0 0.0
        %1179 = vmatpush2.msra.mxu0 0.0
        %1180 = vmatprep.mubr.f32.mxu0 0.0
        %1181 = vmatmul.mubr.f32.gmra.mxu0 %v1111
        %v1182 = vpop.f32.mrf.mxu0
        %v1183 = vadd.f32 0.0, %v1182
        %v1184 = vpop.f32.mrf.mxu0
        %1185 = vmatprep.mubr.f32.mxu0 0.0
        %1186 = vmatmul.mubr.f32.gmra.mxu0 %v1114
        %v1187 = vpop.f32.mrf.mxu0
        %v1188 = vadd.f32 0.0, %v1187
        %v1189 = vpop.f32.mrf.mxu0
        %1190 = vdwg.mxu0
        %v1191 = vsub.f32 %v1017, %v1098
        %v1192 = vsub.f32 %v1022, %v1103
        %v1193 = vsub.f32 %v1183, %v1017
        %v1194 = vsub.f32 %v1188, %v1022
        %v1195 = vsub.f32 %v1193, %v1098
        %v1196 = vsub.f32 %v1194, %v1103
        %v1197 = vld [vmem:[%s9] sm:$0xff]
        %v1198 = vld [vmem:[%s9 + $0x8] sm:$0xff]
        %v1199 = vld [vmem:[%s9 + $0x10] sm:$0xff]
        %v1200 = vld [vmem:[%s9 + $0x18] sm:$0xff]
        %v1201 = vld [vmem:[%s9 + $0x20] sm:$0xff]
        %v1202 = vld [vmem:[%s9 + $0x28] sm:$0xff]
        %v1203 = vld [vmem:[%s9 + $0x30] sm:$0xff]
        %v1204 = vld [vmem:[%s9 + $0x38] sm:$0xff]
        %v1205 = vld [vmem:[%s9 + $0x40] sm:$0xff]
        %v1206 = vld [vmem:[%s9 + $0x48] sm:$0xff]
        %v1207 = vld [vmem:[%s9 + $0x50] sm:$0xff]
        %v1208 = vld [vmem:[%s9 + $0x58] sm:$0xff]
        %v1209 = vld [vmem:[%s9 + $0x60] sm:$0xff]
        %v1210 = vld [vmem:[%s9 + $0x68] sm:$0xff]
        %v1211 = vld [vmem:[%s9 + $0x70] sm:$0xff]
        %v1212 = vld [vmem:[%s9 + $0x78] sm:$0xff]
        %v1213 = vld [vmem:[%s10] sm:$0xff]
        %v1214 = vld [vmem:[%s10 + $0x8] sm:$0xff]
        %v1215 = vld [vmem:[%s10 + $0x10] sm:$0xff]
        %v1216 = vld [vmem:[%s10 + $0x18] sm:$0xff]
        %v1217 = vld [vmem:[%s10 + $0x20] sm:$0xff]
        %v1218 = vld [vmem:[%s10 + $0x28] sm:$0xff]
        %v1219 = vld [vmem:[%s10 + $0x30] sm:$0xff]
        %v1220 = vld [vmem:[%s10 + $0x38] sm:$0xff]
        %v1221 = vld [vmem:[%s10 + $0x40] sm:$0xff]
        %v1222 = vld [vmem:[%s10 + $0x48] sm:$0xff]
        %v1223 = vld [vmem:[%s10 + $0x50] sm:$0xff]
        %v1224 = vld [vmem:[%s10 + $0x58] sm:$0xff]
        %v1225 = vld [vmem:[%s10 + $0x60] sm:$0xff]
        %v1226 = vld [vmem:[%s10 + $0x68] sm:$0xff]
        %v1227 = vld [vmem:[%s10 + $0x70] sm:$0xff]
        %v1228 = vld [vmem:[%s10 + $0x78] sm:$0xff]
        %1229 = vmatprep.subr.mxu0 0.0
        %1230 = vmatpush1.msra.mxu0 %v1212
        %1231 = vmatprep.subr.mxu0 0.0
        %1232 = vmatpush1.msra.mxu0 %v1211
        %1233 = vmatprep.subr.mxu0 0.0
        %1234 = vmatpush1.msra.mxu0 %v1210
        %1235 = vmatprep.subr.mxu0 0.0
        %1236 = vmatpush1.msra.mxu0 %v1209
        %1237 = vmatprep.subr.mxu0 0.0
        %1238 = vmatpush1.msra.mxu0 %v1208
        %1239 = vmatprep.subr.mxu0 0.0
        %1240 = vmatpush1.msra.mxu0 %v1207
        %1241 = vmatprep.subr.mxu0 0.0
        %1242 = vmatpush1.msra.mxu0 %v1206
        %1243 = vmatprep.subr.mxu0 0.0
        %1244 = vmatpush1.msra.mxu0 %v1205
        %1245 = vmatprep.subr.mxu0 0.0
        %1246 = vmatpush1.msra.mxu0 %v1204
        %1247 = vmatprep.subr.mxu0 0.0
        %1248 = vmatpush1.msra.mxu0 %v1203
        %1249 = vmatprep.subr.mxu0 0.0
        %1250 = vmatpush1.msra.mxu0 %v1202
        %1251 = vmatprep.subr.mxu0 0.0
        %1252 = vmatpush1.msra.mxu0 %v1201
        %1253 = vmatprep.subr.mxu0 0.0
        %1254 = vmatpush1.msra.mxu0 %v1200
        %1255 = vmatprep.subr.mxu0 0.0
        %1256 = vmatpush1.msra.mxu0 %v1199
        %1257 = vmatprep.subr.mxu0 0.0
        %1258 = vmatpush1.msra.mxu0 %v1198
        %1259 = vmatprep.subr.mxu0 0.0
        %1260 = vmatpush1.msra.mxu0 %v1197
        %1261 = vmatprep.subr.mxu0 0.0
        %1262 = vmatpush2.msra.mxu0 0.0
        %1263 = vmatprep.subr.mxu0 0.0
        %1264 = vmatpush2.msra.mxu0 0.0
        %1265 = vmatprep.subr.mxu0 0.0
        %1266 = vmatpush2.msra.mxu0 0.0
        %1267 = vmatprep.subr.mxu0 0.0
        %1268 = vmatpush2.msra.mxu0 0.0
        %1269 = vmatprep.subr.mxu0 0.0
        %1270 = vmatpush2.msra.mxu0 0.0
        %1271 = vmatprep.subr.mxu0 0.0
        %1272 = vmatpush2.msra.mxu0 0.0
        %1273 = vmatprep.subr.mxu0 0.0
        %1274 = vmatpush2.msra.mxu0 0.0
        %1275 = vmatprep.subr.mxu0 0.0
        %1276 = vmatpush2.msra.mxu0 0.0
        %1277 = vmatprep.subr.mxu0 0.0
        %1278 = vmatpush2.msra.mxu0 0.0
        %1279 = vmatprep.subr.mxu0 0.0
        %1280 = vmatpush2.msra.mxu0 0.0
        %1281 = vmatprep.subr.mxu0 0.0
        %1282 = vmatpush2.msra.mxu0 0.0
        %1283 = vmatprep.subr.mxu0 0.0
        %1284 = vmatpush2.msra.mxu0 0.0
        %1285 = vmatprep.subr.mxu0 0.0
        %1286 = vmatpush2.msra.mxu0 0.0
        %1287 = vmatprep.subr.mxu0 0.0
        %1288 = vmatpush2.msra.mxu0 0.0
        %1289 = vmatprep.subr.mxu0 0.0
        %1290 = vmatpush2.msra.mxu0 0.0
        %1291 = vmatprep.subr.mxu0 0.0
        %1292 = vmatpush2.msra.mxu0 0.0
        %1293 = vmatprep.mubr.f32.mxu0 0.0
        %1294 = vmatmul.mubr.f32.gmra.mxu0 %v1191
        %v1295 = vpop.f32.mrf.mxu0
        %v1296 = vadd.f32 0.0, %v1295
        %v1297 = vpop.f32.mrf.mxu0
        %1298 = vmatprep.mubr.f32.mxu0 0.0
        %1299 = vmatmul.mubr.f32.gmra.mxu0 %v1192
        %v1300 = vpop.f32.mrf.mxu0
        %v1301 = vadd.f32 0.0, %v1300
        %v1302 = vpop.f32.mrf.mxu0
        %1303 = vdwg.mxu0
        %1304 = vmatprep.subr.mxu0 0.0
        %1305 = vmatpush1.msra.mxu0 %v1228
        %1306 = vmatprep.subr.mxu0 0.0
        %1307 = vmatpush1.msra.mxu0 %v1227
        %1308 = vmatprep.subr.mxu0 0.0
        %1309 = vmatpush1.msra.mxu0 %v1226
        %1310 = vmatprep.subr.mxu0 0.0
        %1311 = vmatpush1.msra.mxu0 %v1225
        %1312 = vmatprep.subr.mxu0 0.0
        %1313 = vmatpush1.msra.mxu0 %v1224
        %1314 = vmatprep.subr.mxu0 0.0
        %1315 = vmatpush1.msra.mxu0 %v1223
        %1316 = vmatprep.subr.mxu0 0.0
        %1317 = vmatpush1.msra.mxu0 %v1222
        %1318 = vmatprep.subr.mxu0 0.0
        %1319 = vmatpush1.msra.mxu0 %v1221
        %1320 = vmatprep.subr.mxu0 0.0
        %1321 = vmatpush1.msra.mxu0 %v1220
        %1322 = vmatprep.subr.mxu0 0.0
        %1323 = vmatpush1.msra.mxu0 %v1219
        %1324 = vmatprep.subr.mxu0 0.0
        %1325 = vmatpush1.msra.mxu0 %v1218
        %1326 = vmatprep.subr.mxu0 0.0
        %1327 = vmatpush1.msra.mxu0 %v1217
        %1328 = vmatprep.subr.mxu0 0.0
        %1329 = vmatpush1.msra.mxu0 %v1216
        %1330 = vmatprep.subr.mxu0 0.0
        %1331 = vmatpush1.msra.mxu0 %v1215
        %1332 = vmatprep.subr.mxu0 0.0
        %1333 = vmatpush1.msra.mxu0 %v1214
        %1334 = vmatprep.subr.mxu0 0.0
        %1335 = vmatpush1.msra.mxu0 %v1213
        %1336 = vmatprep.subr.mxu0 0.0
        %1337 = vmatpush2.msra.mxu0 0.0
        %1338 = vmatprep.subr.mxu0 0.0
        %1339 = vmatpush2.msra.mxu0 0.0
        %1340 = vmatprep.subr.mxu0 0.0
        %1341 = vmatpush2.msra.mxu0 0.0
        %1342 = vmatprep.subr.mxu0 0.0
        %1343 = vmatpush2.msra.mxu0 0.0
        %1344 = vmatprep.subr.mxu0 0.0
        %1345 = vmatpush2.msra.mxu0 0.0
        %1346 = vmatprep.subr.mxu0 0.0
        %1347 = vmatpush2.msra.mxu0 0.0
        %1348 = vmatprep.subr.mxu0 0.0
        %1349 = vmatpush2.msra.mxu0 0.0
        %1350 = vmatprep.subr.mxu0 0.0
        %1351 = vmatpush2.msra.mxu0 0.0
        %1352 = vmatprep.subr.mxu0 0.0
        %1353 = vmatpush2.msra.mxu0 0.0
        %1354 = vmatprep.subr.mxu0 0.0
        %1355 = vmatpush2.msra.mxu0 0.0
        %1356 = vmatprep.subr.mxu0 0.0
        %1357 = vmatpush2.msra.mxu0 0.0
        %1358 = vmatprep.subr.mxu0 0.0
        %1359 = vmatpush2.msra.mxu0 0.0
        %1360 = vmatprep.subr.mxu0 0.0
        %1361 = vmatpush2.msra.mxu0 0.0
        %1362 = vmatprep.subr.mxu0 0.0
        %1363 = vmatpush2.msra.mxu0 0.0
        %1364 = vmatprep.subr.mxu0 0.0
        %1365 = vmatpush2.msra.mxu0 0.0
        %1366 = vmatprep.subr.mxu0 0.0
        %1367 = vmatpush2.msra.mxu0 0.0
        %1368 = vmatprep.mubr.f32.mxu0 0.0
        %1369 = vmatmul.mubr.f32.gmra.mxu0 %v1195
        %v1370 = vpop.f32.mrf.mxu0
        %v1371 = vadd.f32 0.0, %v1370
        %v1372 = vpop.f32.mrf.mxu0
        %1373 = vmatprep.mubr.f32.mxu0 0.0
        %1374 = vmatmul.mubr.f32.gmra.mxu0 %v1196
        %v1375 = vpop.f32.mrf.mxu0
        %v1376 = vadd.f32 0.0, %v1375
        %v1377 = vpop.f32.mrf.mxu0
        %1378 = vdwg.mxu0
        %v1379 = vadd.f32 %v1191, %v1195
        %v1380 = vadd.f32 %v1192, %v1196
        %v1381 = vadd.f32 %v1197, %v1213
        %v1382 = vadd.f32 %v1198, %v1214
        %v1383 = vadd.f32 %v1199, %v1215
        %v1384 = vadd.f32 %v1200, %v1216
        %v1385 = vadd.f32 %v1201, %v1217
        %v1386 = vadd.f32 %v1202, %v1218
        %v1387 = vadd.f32 %v1203, %v1219
        %v1388 = vadd.f32 %v1204, %v1220
        %v1389 = vadd.f32 %v1205, %v1221
        %v1390 = vadd.f32 %v1206, %v1222
        %v1391 = vadd.f32 %v1207, %v1223
        %v1392 = vadd.f32 %v1208, %v1224
        %v1393 = vadd.f32 %v1209, %v1225
        %v1394 = vadd.f32 %v1210, %v1226
        %v1395 = vadd.f32 %v1211, %v1227
        %v1396 = vadd.f32 %v1212, %v1228
        %1397 = vmatprep.subr.mxu0 0.0
        %1398 = vmatpush1.msra.mxu0 %v1396
        %1399 = vmatprep.subr.mxu0 0.0
        %1400 = vmatpush1.msra.mxu0 %v1395
        %1401 = vmatprep.subr.mxu0 0.0
        %1402 = vmatpush1.msra.mxu0 %v1394
        %1403 = vmatprep.subr.mxu0 0.0
        %1404 = vmatpush1.msra.mxu0 %v1393
        %1405 = vmatprep.subr.mxu0 0.0
        %1406 = vmatpush1.msra.mxu0 %v1392
        %1407 = vmatprep.subr.mxu0 0.0
        %1408 = vmatpush1.msra.mxu0 %v1391
        %1409 = vmatprep.subr.mxu0 0.0
        %1410 = vmatpush1.msra.mxu0 %v1390
        %1411 = vmatprep.subr.mxu0 0.0
        %1412 = vmatpush1.msra.mxu0 %v1389
        %1413 = vmatprep.subr.mxu0 0.0
        %1414 = vmatpush1.msra.mxu0 %v1388
        %1415 = vmatprep.subr.mxu0 0.0
        %1416 = vmatpush1.msra.mxu0 %v1387
        %1417 = vmatprep.subr.mxu0 0.0
        %1418 = vmatpush1.msra.mxu0 %v1386
        %1419 = vmatprep.subr.mxu0 0.0
        %1420 = vmatpush1.msra.mxu0 %v1385
        %1421 = vmatprep.subr.mxu0 0.0
        %1422 = vmatpush1.msra.mxu0 %v1384
        %1423 = vmatprep.subr.mxu0 0.0
        %1424 = vmatpush1.msra.mxu0 %v1383
        %1425 = vmatprep.subr.mxu0 0.0
        %1426 = vmatpush1.msra.mxu0 %v1382
        %1427 = vmatprep.subr.mxu0 0.0
        %1428 = vmatpush1.msra.mxu0 %v1381
        %1429 = vmatprep.subr.mxu0 0.0
        %1430 = vmatpush2.msra.mxu0 0.0
        %1431 = vmatprep.subr.mxu0 0.0
        %1432 = vmatpush2.msra.mxu0 0.0
        %1433 = vmatprep.subr.mxu0 0.0
        %1434 = vmatpush2.msra.mxu0 0.0
        %1435 = vmatprep.subr.mxu0 0.0
        %1436 = vmatpush2.msra.mxu0 0.0
        %1437 = vmatprep.subr.mxu0 0.0
        %1438 = vmatpush2.msra.mxu0 0.0
        %1439 = vmatprep.subr.mxu0 0.0
        %1440 = vmatpush2.msra.mxu0 0.0
        %1441 = vmatprep.subr.mxu0 0.0
        %1442 = vmatpush2.msra.mxu0 0.0
        %1443 = vmatprep.subr.mxu0 0.0
        %1444 = vmatpush2.msra.mxu0 0.0
        %1445 = vmatprep.subr.mxu0 0.0
        %1446 = vmatpush2.msra.mxu0 0.0
        %1447 = vmatprep.subr.mxu0 0.0
        %1448 = vmatpush2.msra.mxu0 0.0
        %1449 = vmatprep.subr.mxu0 0.0
        %1450 = vmatpush2.msra.mxu0 0.0
        %1451 = vmatprep.subr.mxu0 0.0
        %1452 = vmatpush2.msra.mxu0 0.0
        %1453 = vmatprep.subr.mxu0 0.0
        %1454 = vmatpush2.msra.mxu0 0.0
        %1455 = vmatprep.subr.mxu0 0.0
        %1456 = vmatpush2.msra.mxu0 0.0
        %1457 = vmatprep.subr.mxu0 0.0
        %1458 = vmatpush2.msra.mxu0 0.0
        %1459 = vmatprep.subr.mxu0 0.0
        %1460 = vmatpush2.msra.mxu0 0.0
        %1461 = vmatprep.mubr.f32.mxu0 0.0
        %1462 = vmatmul.mubr.f32.gmra.mxu0 %v1379
        %v1463 = vpop.f32.mrf.mxu0
        %v1464 = vadd.f32 0.0, %v1463
        %v1465 = vpop.f32.mrf.mxu0
        %1466 = vmatprep.mubr.f32.mxu0 0.0
        %1467 = vmatmul.mubr.f32.gmra.mxu0 %v1380
        %v1468 = vpop.f32.mrf.mxu0
        %v1469 = vadd.f32 0.0, %v1468
        %v1470 = vpop.f32.mrf.mxu0
        %1471 = vdwg.mxu0
        %v1472 = vsub.f32 %v1296, %v1371
        %v1473 = vsub.f32 %v1301, %v1376
        %v1474 = vsub.f32 %v1464, %v1296
        %v1475 = vsub.f32 %v1469, %v1301
        %v1476 = vsub.f32 %v1474, %v1371
        %v1477 = vsub.f32 %v1475, %v1376
        %v1478 = vmul.f32 %v1472, %v926
        %v1479 = vmul.f32 %v1473, %v927
        %v1480 = vmul.f32 %v1476, %v926
        %v1481 = vmul.f32 %v1477, %v927
        %v1482 = vld [vmem:[%s11] sm:$0xff]
        %v1483 = vld [vmem:[%s11 + $0x8] sm:$0xff]
        %v1484 = vld [vmem:[%s12] sm:$0xff]
        %v1485 = vld [vmem:[%s12 + $0x8] sm:$0xff]
        %v1487 = vsel %vm759, %v1482, 0
        %v1490 = vsel %vm759, %v1483, 0
        %1492 = vmatprep.subr.mxu0 0.0
        %1493 = vmatpush1.msra.mxu0 0.0
        %1494 = vmatprep.subr.mxu0 0.0
        %1495 = vmatpush1.msra.mxu0 0.0
        %1496 = vmatprep.subr.mxu0 0.0
        %1497 = vmatpush1.msra.mxu0 0.0
        %1498 = vmatprep.subr.mxu0 0.0
        %1499 = vmatpush1.msra.mxu0 0.0
        %1500 = vmatprep.subr.mxu0 0.0
        %1501 = vmatpush1.msra.mxu0 0.0
        %1502 = vmatprep.subr.mxu0 0.0
        %1503 = vmatpush1.msra.mxu0 0.0
        %1504 = vmatprep.subr.mxu0 0.0
        %1505 = vmatpush1.msra.mxu0 0.0
        %1506 = vmatprep.subr.mxu0 0.0
        %1507 = vmatpush1.msra.mxu0 0.0
        %1508 = vmatprep.subr.mxu0 0.0
        %1509 = vmatpush1.msra.mxu0 0.0
        %1510 = vmatprep.subr.mxu0 0.0
        %1511 = vmatpush1.msra.mxu0 0.0
        %1512 = vmatprep.subr.mxu0 0.0
        %1513 = vmatpush1.msra.mxu0 0.0
        %1514 = vmatprep.subr.mxu0 0.0
        %1515 = vmatpush1.msra.mxu0 0.0
        %1516 = vmatprep.subr.mxu0 0.0
        %1517 = vmatpush1.msra.mxu0 0.0
        %1518 = vmatprep.subr.mxu0 0.0
        %1519 = vmatpush1.msra.mxu0 0.0
        %1520 = vmatprep.subr.mxu0 0.0
        %1521 = vmatpush1.msra.mxu0 %v1479
        %1522 = vmatprep.subr.mxu0 0.0
        %1523 = vmatpush1.msra.mxu0 %v1478
        %1524 = vmatprep.subr.mxu0 0.0
        %1525 = vmatpush2.msra.mxu0 0.0
        %1526 = vmatprep.subr.mxu0 0.0
        %1527 = vmatpush2.msra.mxu0 0.0
        %1528 = vmatprep.subr.mxu0 0.0
        %1529 = vmatpush2.msra.mxu0 0.0
        %1530 = vmatprep.subr.mxu0 0.0
        %1531 = vmatpush2.msra.mxu0 0.0
        %1532 = vmatprep.subr.mxu0 0.0
        %1533 = vmatpush2.msra.mxu0 0.0
        %1534 = vmatprep.subr.mxu0 0.0
        %1535 = vmatpush2.msra.mxu0 0.0
        %1536 = vmatprep.subr.mxu0 0.0
        %1537 = vmatpush2.msra.mxu0 0.0
        %1538 = vmatprep.subr.mxu0 0.0
        %1539 = vmatpush2.msra.mxu0 0.0
        %1540 = vmatprep.subr.mxu0 0.0
        %1541 = vmatpush2.msra.mxu0 0.0
        %1542 = vmatprep.subr.mxu0 0.0
        %1543 = vmatpush2.msra.mxu0 0.0
        %1544 = vmatprep.subr.mxu0 0.0
        %1545 = vmatpush2.msra.mxu0 0.0
        %1546 = vmatprep.subr.mxu0 0.0
        %1547 = vmatpush2.msra.mxu0 0.0
        %1548 = vmatprep.subr.mxu0 0.0
        %1549 = vmatpush2.msra.mxu0 0.0
        %1550 = vmatprep.subr.mxu0 0.0
        %1551 = vmatpush2.msra.mxu0 0.0
        %1552 = vmatprep.subr.mxu0 0.0
        %1553 = vmatpush2.msra.mxu0 0.0
        %1554 = vmatprep.subr.mxu0 0.0
        %1555 = vmatpush2.msra.mxu0 0.0
        %1556 = vmatprep.mubr.f32.mxu0 0.0
        %1557 = vmatmul.mubr.f32.gmra.mxu0 %v1487
        %v1558 = vpop.f32.mrf.mxu0
        %v1559 = vadd.f32 0.0, %v1558
        %v1560 = vpop.f32.mrf.mxu0
        %1561 = vmatprep.mubr.f32.mxu0 0.0
        %1562 = vmatmul.mubr.f32.gmra.mxu0 %v1490
        %v1563 = vpop.f32.mrf.mxu0
        %v1564 = vadd.f32 0.0, %v1563
        %v1565 = vpop.f32.mrf.mxu0
        %1566 = vdwg.mxu0
        %v1568 = vsel %vm759, %v1484, 0
        %v1571 = vsel %vm759, %v1485, 0
        %1573 = vmatprep.subr.mxu0 0.0
        %1574 = vmatpush1.msra.mxu0 0.0
        %1575 = vmatprep.subr.mxu0 0.0
        %1576 = vmatpush1.msra.mxu0 0.0
        %1577 = vmatprep.subr.mxu0 0.0
        %1578 = vmatpush1.msra.mxu0 0.0
        %1579 = vmatprep.subr.mxu0 0.0
        %1580 = vmatpush1.msra.mxu0 0.0
        %1581 = vmatprep.subr.mxu0 0.0
        %1582 = vmatpush1.msra.mxu0 0.0
        %1583 = vmatprep.subr.mxu0 0.0
        %1584 = vmatpush1.msra.mxu0 0.0
        %1585 = vmatprep.subr.mxu0 0.0
        %1586 = vmatpush1.msra.mxu0 0.0
        %1587 = vmatprep.subr.mxu0 0.0
        %1588 = vmatpush1.msra.mxu0 0.0
        %1589 = vmatprep.subr.mxu0 0.0
        %1590 = vmatpush1.msra.mxu0 0.0
        %1591 = vmatprep.subr.mxu0 0.0
        %1592 = vmatpush1.msra.mxu0 0.0
        %1593 = vmatprep.subr.mxu0 0.0
        %1594 = vmatpush1.msra.mxu0 0.0
        %1595 = vmatprep.subr.mxu0 0.0
        %1596 = vmatpush1.msra.mxu0 0.0
        %1597 = vmatprep.subr.mxu0 0.0
        %1598 = vmatpush1.msra.mxu0 0.0
        %1599 = vmatprep.subr.mxu0 0.0
        %1600 = vmatpush1.msra.mxu0 0.0
        %1601 = vmatprep.subr.mxu0 0.0
        %1602 = vmatpush1.msra.mxu0 %v1481
        %1603 = vmatprep.subr.mxu0 0.0
        %1604 = vmatpush1.msra.mxu0 %v1480
        %1605 = vmatprep.subr.mxu0 0.0
        %1606 = vmatpush2.msra.mxu0 0.0
        %1607 = vmatprep.subr.mxu0 0.0
        %1608 = vmatpush2.msra.mxu0 0.0
        %1609 = vmatprep.subr.mxu0 0.0
        %1610 = vmatpush2.msra.mxu0 0.0
        %1611 = vmatprep.subr.mxu0 0.0
        %1612 = vmatpush2.msra.mxu0 0.0
        %1613 = vmatprep.subr.mxu0 0.0
        %1614 = vmatpush2.msra.mxu0 0.0
        %1615 = vmatprep.subr.mxu0 0.0
        %1616 = vmatpush2.msra.mxu0 0.0
        %1617 = vmatprep.subr.mxu0 0.0
        %1618 = vmatpush2.msra.mxu0 0.0
        %1619 = vmatprep.subr.mxu0 0.0
        %1620 = vmatpush2.msra.mxu0 0.0
        %1621 = vmatprep.subr.mxu0 0.0
        %1622 = vmatpush2.msra.mxu0 0.0
        %1623 = vmatprep.subr.mxu0 0.0
        %1624 = vmatpush2.msra.mxu0 0.0
        %1625 = vmatprep.subr.mxu0 0.0
        %1626 = vmatpush2.msra.mxu0 0.0
        %1627 = vmatprep.subr.mxu0 0.0
        %1628 = vmatpush2.msra.mxu0 0.0
        %1629 = vmatprep.subr.mxu0 0.0
        %1630 = vmatpush2.msra.mxu0 0.0
        %1631 = vmatprep.subr.mxu0 0.0
        %1632 = vmatpush2.msra.mxu0 0.0
        %1633 = vmatprep.subr.mxu0 0.0
        %1634 = vmatpush2.msra.mxu0 0.0
        %1635 = vmatprep.subr.mxu0 0.0
        %1636 = vmatpush2.msra.mxu0 0.0
        %1637 = vmatprep.mubr.f32.mxu0 0.0
        %1638 = vmatmul.mubr.f32.gmra.mxu0 %v1568
        %v1639 = vpop.f32.mrf.mxu0
        %v1640 = vadd.f32 0.0, %v1639
        %v1641 = vpop.f32.mrf.mxu0
        %1642 = vmatprep.mubr.f32.mxu0 0.0
        %1643 = vmatmul.mubr.f32.gmra.mxu0 %v1571
        %v1644 = vpop.f32.mrf.mxu0
        %v1645 = vadd.f32 0.0, %v1644
        %v1646 = vpop.f32.mrf.mxu0
        %1647 = vdwg.mxu0
        %v1648 = vadd.f32 %v1482, %v1484
        %v1649 = vadd.f32 %v1483, %v1485
        %v1650 = vadd.f32 %v1478, %v1480
        %v1651 = vadd.f32 %v1479, %v1481
        %v1653 = vsel %vm759, %v1648, 0
        %v1656 = vsel %vm759, %v1649, 0
        %1658 = vmatprep.subr.mxu0 0.0
        %1659 = vmatpush1.msra.mxu0 0.0
        %1660 = vmatprep.subr.mxu0 0.0
        %1661 = vmatpush1.msra.mxu0 0.0
        %1662 = vmatprep.subr.mxu0 0.0
        %1663 = vmatpush1.msra.mxu0 0.0
        %1664 = vmatprep.subr.mxu0 0.0
        %1665 = vmatpush1.msra.mxu0 0.0
        %1666 = vmatprep.subr.mxu0 0.0
        %1667 = vmatpush1.msra.mxu0 0.0
        %1668 = vmatprep.subr.mxu0 0.0
        %1669 = vmatpush1.msra.mxu0 0.0
        %1670 = vmatprep.subr.mxu0 0.0
        %1671 = vmatpush1.msra.mxu0 0.0
        %1672 = vmatprep.subr.mxu0 0.0
        %1673 = vmatpush1.msra.mxu0 0.0
        %1674 = vmatprep.subr.mxu0 0.0
        %1675 = vmatpush1.msra.mxu0 0.0
        %1676 = vmatprep.subr.mxu0 0.0
        %1677 = vmatpush1.msra.mxu0 0.0
        %1678 = vmatprep.subr.mxu0 0.0
        %1679 = vmatpush1.msra.mxu0 0.0
        %1680 = vmatprep.subr.mxu0 0.0
        %1681 = vmatpush1.msra.mxu0 0.0
        %1682 = vmatprep.subr.mxu0 0.0
        %1683 = vmatpush1.msra.mxu0 0.0
        %1684 = vmatprep.subr.mxu0 0.0
        %1685 = vmatpush1.msra.mxu0 0.0
        %1686 = vmatprep.subr.mxu0 0.0
        %1687 = vmatpush1.msra.mxu0 %v1651
        %1688 = vmatprep.subr.mxu0 0.0
        %1689 = vmatpush1.msra.mxu0 %v1650
        %1690 = vmatprep.subr.mxu0 0.0
        %1691 = vmatpush2.msra.mxu0 0.0
        %1692 = vmatprep.subr.mxu0 0.0
        %1693 = vmatpush2.msra.mxu0 0.0
        %1694 = vmatprep.subr.mxu0 0.0
        %1695 = vmatpush2.msra.mxu0 0.0
        %1696 = vmatprep.subr.mxu0 0.0
        %1697 = vmatpush2.msra.mxu0 0.0
        %1698 = vmatprep.subr.mxu0 0.0
        %1699 = vmatpush2.msra.mxu0 0.0
        %1700 = vmatprep.subr.mxu0 0.0
        %1701 = vmatpush2.msra.mxu0 0.0
        %1702 = vmatprep.subr.mxu0 0.0
        %1703 = vmatpush2.msra.mxu0 0.0
        %1704 = vmatprep.subr.mxu0 0.0
        %1705 = vmatpush2.msra.mxu0 0.0
        %1706 = vmatprep.subr.mxu0 0.0
        %1707 = vmatpush2.msra.mxu0 0.0
        %1708 = vmatprep.subr.mxu0 0.0
        %1709 = vmatpush2.msra.mxu0 0.0
        %1710 = vmatprep.subr.mxu0 0.0
        %1711 = vmatpush2.msra.mxu0 0.0
        %1712 = vmatprep.subr.mxu0 0.0
        %1713 = vmatpush2.msra.mxu0 0.0
        %1714 = vmatprep.subr.mxu0 0.0
        %1715 = vmatpush2.msra.mxu0 0.0
        %1716 = vmatprep.subr.mxu0 0.0
        %1717 = vmatpush2.msra.mxu0 0.0
        %1718 = vmatprep.subr.mxu0 0.0
        %1719 = vmatpush2.msra.mxu0 0.0
        %1720 = vmatprep.subr.mxu0 0.0
        %1721 = vmatpush2.msra.mxu0 0.0
        %1722 = vmatprep.mubr.f32.mxu0 0.0
        %1723 = vmatmul.mubr.f32.gmra.mxu0 %v1653
        %v1724 = vpop.f32.mrf.mxu0
        %v1725 = vadd.f32 0.0, %v1724
        %v1726 = vpop.f32.mrf.mxu0
        %1727 = vmatprep.mubr.f32.mxu0 0.0
        %1728 = vmatmul.mubr.f32.gmra.mxu0 %v1656
        %v1729 = vpop.f32.mrf.mxu0
        %v1730 = vadd.f32 0.0, %v1729
        %v1731 = vpop.f32.mrf.mxu0
        %1732 = vdwg.mxu0
        %v1733 = vsub.f32 %v1559, %v1640
        %v1734 = vsub.f32 %v1564, %v1645
        %v1735 = vsub.f32 %v1725, %v1559
        %v1736 = vsub.f32 %v1730, %v1564
        %v1737 = vsub.f32 %v1735, %v1640
        %v1738 = vsub.f32 %v1736, %v1645
        %v1739 = vld [vmem:[%s13] sm:$0xff]
        %v1740 = vld [vmem:[%s13 + $0x8] sm:$0xff]
        %v1741 = vld [vmem:[%s13 + $0x10] sm:$0xff]
        %v1742 = vld [vmem:[%s13 + $0x18] sm:$0xff]
        %v1743 = vld [vmem:[%s13 + $0x20] sm:$0xff]
        %v1744 = vld [vmem:[%s13 + $0x28] sm:$0xff]
        %v1745 = vld [vmem:[%s13 + $0x30] sm:$0xff]
        %v1746 = vld [vmem:[%s13 + $0x38] sm:$0xff]
        %v1747 = vld [vmem:[%s13 + $0x40] sm:$0xff]
        %v1748 = vld [vmem:[%s13 + $0x48] sm:$0xff]
        %v1749 = vld [vmem:[%s13 + $0x50] sm:$0xff]
        %v1750 = vld [vmem:[%s13 + $0x58] sm:$0xff]
        %v1751 = vld [vmem:[%s13 + $0x60] sm:$0xff]
        %v1752 = vld [vmem:[%s13 + $0x68] sm:$0xff]
        %v1753 = vld [vmem:[%s13 + $0x70] sm:$0xff]
        %v1754 = vld [vmem:[%s13 + $0x78] sm:$0xff]
        %v1755 = vld [vmem:[%s14] sm:$0xff]
        %v1756 = vld [vmem:[%s14 + $0x8] sm:$0xff]
        %v1757 = vld [vmem:[%s14 + $0x10] sm:$0xff]
        %v1758 = vld [vmem:[%s14 + $0x18] sm:$0xff]
        %v1759 = vld [vmem:[%s14 + $0x20] sm:$0xff]
        %v1760 = vld [vmem:[%s14 + $0x28] sm:$0xff]
        %v1761 = vld [vmem:[%s14 + $0x30] sm:$0xff]
        %v1762 = vld [vmem:[%s14 + $0x38] sm:$0xff]
        %v1763 = vld [vmem:[%s14 + $0x40] sm:$0xff]
        %v1764 = vld [vmem:[%s14 + $0x48] sm:$0xff]
        %v1765 = vld [vmem:[%s14 + $0x50] sm:$0xff]
        %v1766 = vld [vmem:[%s14 + $0x58] sm:$0xff]
        %v1767 = vld [vmem:[%s14 + $0x60] sm:$0xff]
        %v1768 = vld [vmem:[%s14 + $0x68] sm:$0xff]
        %v1769 = vld [vmem:[%s14 + $0x70] sm:$0xff]
        %v1770 = vld [vmem:[%s14 + $0x78] sm:$0xff]
        %1771 = vmatprep.subr.mxu0 0.0
        %1772 = vmatpush1.msra.mxu0 %v1754
        %1773 = vmatprep.subr.mxu0 0.0
        %1774 = vmatpush1.msra.mxu0 %v1753
        %1775 = vmatprep.subr.mxu0 0.0
        %1776 = vmatpush1.msra.mxu0 %v1752
        %1777 = vmatprep.subr.mxu0 0.0
        %1778 = vmatpush1.msra.mxu0 %v1751
        %1779 = vmatprep.subr.mxu0 0.0
        %1780 = vmatpush1.msra.mxu0 %v1750
        %1781 = vmatprep.subr.mxu0 0.0
        %1782 = vmatpush1.msra.mxu0 %v1749
        %1783 = vmatprep.subr.mxu0 0.0
        %1784 = vmatpush1.msra.mxu0 %v1748
        %1785 = vmatprep.subr.mxu0 0.0
        %1786 = vmatpush1.msra.mxu0 %v1747
        %1787 = vmatprep.subr.mxu0 0.0
        %1788 = vmatpush1.msra.mxu0 %v1746
        %1789 = vmatprep.subr.mxu0 0.0
        %1790 = vmatpush1.msra.mxu0 %v1745
        %1791 = vmatprep.subr.mxu0 0.0
        %1792 = vmatpush1.msra.mxu0 %v1744
        %1793 = vmatprep.subr.mxu0 0.0
        %1794 = vmatpush1.msra.mxu0 %v1743
        %1795 = vmatprep.subr.mxu0 0.0
        %1796 = vmatpush1.msra.mxu0 %v1742
        %1797 = vmatprep.subr.mxu0 0.0
        %1798 = vmatpush1.msra.mxu0 %v1741
        %1799 = vmatprep.subr.mxu0 0.0
        %1800 = vmatpush1.msra.mxu0 %v1740
        %1801 = vmatprep.subr.mxu0 0.0
        %1802 = vmatpush1.msra.mxu0 %v1739
        %1803 = vmatprep.subr.mxu0 0.0
        %1804 = vmatpush2.msra.mxu0 0.0
        %1805 = vmatprep.subr.mxu0 0.0
        %1806 = vmatpush2.msra.mxu0 0.0
        %1807 = vmatprep.subr.mxu0 0.0
        %1808 = vmatpush2.msra.mxu0 0.0
        %1809 = vmatprep.subr.mxu0 0.0
        %1810 = vmatpush2.msra.mxu0 0.0
        %1811 = vmatprep.subr.mxu0 0.0
        %1812 = vmatpush2.msra.mxu0 0.0
        %1813 = vmatprep.subr.mxu0 0.0
        %1814 = vmatpush2.msra.mxu0 0.0
        %1815 = vmatprep.subr.mxu0 0.0
        %1816 = vmatpush2.msra.mxu0 0.0
        %1817 = vmatprep.subr.mxu0 0.0
        %1818 = vmatpush2.msra.mxu0 0.0
        %1819 = vmatprep.subr.mxu0 0.0
        %1820 = vmatpush2.msra.mxu0 0.0
        %1821 = vmatprep.subr.mxu0 0.0
        %1822 = vmatpush2.msra.mxu0 0.0
        %1823 = vmatprep.subr.mxu0 0.0
        %1824 = vmatpush2.msra.mxu0 0.0
        %1825 = vmatprep.subr.mxu0 0.0
        %1826 = vmatpush2.msra.mxu0 0.0
        %1827 = vmatprep.subr.mxu0 0.0
        %1828 = vmatpush2.msra.mxu0 0.0
        %1829 = vmatprep.subr.mxu0 0.0
        %1830 = vmatpush2.msra.mxu0 0.0
        %1831 = vmatprep.subr.mxu0 0.0
        %1832 = vmatpush2.msra.mxu0 0.0
        %1833 = vmatprep.subr.mxu0 0.0
        %1834 = vmatpush2.msra.mxu0 0.0
        %1835 = vmatprep.mubr.f32.mxu0 0.0
        %1836 = vmatmul.mubr.f32.gmra.mxu0 %v1733
        %v1837 = vpop.f32.mrf.mxu0
        %v1838 = vadd.f32 0.0, %v1837
        %v1839 = vpop.f32.mrf.mxu0
        %1840 = vmatprep.mubr.f32.mxu0 0.0
        %1841 = vmatmul.mubr.f32.gmra.mxu0 %v1734
        %v1842 = vpop.f32.mrf.mxu0
        %v1843 = vadd.f32 0.0, %v1842
        %v1844 = vpop.f32.mrf.mxu0
        %1845 = vdwg.mxu0
        %1846 = vmatprep.subr.mxu0 0.0
        %1847 = vmatpush1.msra.mxu0 %v1770
        %1848 = vmatprep.subr.mxu0 0.0
        %1849 = vmatpush1.msra.mxu0 %v1769
        %1850 = vmatprep.subr.mxu0 0.0
        %1851 = vmatpush1.msra.mxu0 %v1768
        %1852 = vmatprep.subr.mxu0 0.0
        %1853 = vmatpush1.msra.mxu0 %v1767
        %1854 = vmatprep.subr.mxu0 0.0
        %1855 = vmatpush1.msra.mxu0 %v1766
        %1856 = vmatprep.subr.mxu0 0.0
        %1857 = vmatpush1.msra.mxu0 %v1765
        %1858 = vmatprep.subr.mxu0 0.0
        %1859 = vmatpush1.msra.mxu0 %v1764
        %1860 = vmatprep.subr.mxu0 0.0
        %1861 = vmatpush1.msra.mxu0 %v1763
        %1862 = vmatprep.subr.mxu0 0.0
        %1863 = vmatpush1.msra.mxu0 %v1762
        %1864 = vmatprep.subr.mxu0 0.0
        %1865 = vmatpush1.msra.mxu0 %v1761
        %1866 = vmatprep.subr.mxu0 0.0
        %1867 = vmatpush1.msra.mxu0 %v1760
        %1868 = vmatprep.subr.mxu0 0.0
        %1869 = vmatpush1.msra.mxu0 %v1759
        %1870 = vmatprep.subr.mxu0 0.0
        %1871 = vmatpush1.msra.mxu0 %v1758
        %1872 = vmatprep.subr.mxu0 0.0
        %1873 = vmatpush1.msra.mxu0 %v1757
        %1874 = vmatprep.subr.mxu0 0.0
        %1875 = vmatpush1.msra.mxu0 %v1756
        %1876 = vmatprep.subr.mxu0 0.0
        %1877 = vmatpush1.msra.mxu0 %v1755
        %1878 = vmatprep.subr.mxu0 0.0
        %1879 = vmatpush2.msra.mxu0 0.0
        %1880 = vmatprep.subr.mxu0 0.0
        %1881 = vmatpush2.msra.mxu0 0.0
        %1882 = vmatprep.subr.mxu0 0.0
        %1883 = vmatpush2.msra.mxu0 0.0
        %1884 = vmatprep.subr.mxu0 0.0
        %1885 = vmatpush2.msra.mxu0 0.0
        %1886 = vmatprep.subr.mxu0 0.0
        %1887 = vmatpush2.msra.mxu0 0.0
        %1888 = vmatprep.subr.mxu0 0.0
        %1889 = vmatpush2.msra.mxu0 0.0
        %1890 = vmatprep.subr.mxu0 0.0
        %1891 = vmatpush2.msra.mxu0 0.0
        %1892 = vmatprep.subr.mxu0 0.0
        %1893 = vmatpush2.msra.mxu0 0.0
        %1894 = vmatprep.subr.mxu0 0.0
        %1895 = vmatpush2.msra.mxu0 0.0
        %1896 = vmatprep.subr.mxu0 0.0
        %1897 = vmatpush2.msra.mxu0 0.0
        %1898 = vmatprep.subr.mxu0 0.0
        %1899 = vmatpush2.msra.mxu0 0.0
        %1900 = vmatprep.subr.mxu0 0.0
        %1901 = vmatpush2.msra.mxu0 0.0
        %1902 = vmatprep.subr.mxu0 0.0
        %1903 = vmatpush2.msra.mxu0 0.0
        %1904 = vmatprep.subr.mxu0 0.0
        %1905 = vmatpush2.msra.mxu0 0.0
        %1906 = vmatprep.subr.mxu0 0.0
        %1907 = vmatpush2.msra.mxu0 0.0
        %1908 = vmatprep.subr.mxu0 0.0
        %1909 = vmatpush2.msra.mxu0 0.0
        %1910 = vmatprep.mubr.f32.mxu0 0.0
        %1911 = vmatmul.mubr.f32.gmra.mxu0 %v1737
        %v1912 = vpop.f32.mrf.mxu0
        %v1913 = vadd.f32 0.0, %v1912
        %v1914 = vpop.f32.mrf.mxu0
        %1915 = vmatprep.mubr.f32.mxu0 0.0
        %1916 = vmatmul.mubr.f32.gmra.mxu0 %v1738
        %v1917 = vpop.f32.mrf.mxu0
        %v1918 = vadd.f32 0.0, %v1917
        %v1919 = vpop.f32.mrf.mxu0
        %1920 = vdwg.mxu0
        %v1921 = vadd.f32 %v1733, %v1737
        %v1922 = vadd.f32 %v1734, %v1738
        %v1923 = vadd.f32 %v1739, %v1755
        %v1924 = vadd.f32 %v1740, %v1756
        %v1925 = vadd.f32 %v1741, %v1757
        %v1926 = vadd.f32 %v1742, %v1758
        %v1927 = vadd.f32 %v1743, %v1759
        %v1928 = vadd.f32 %v1744, %v1760
        %v1929 = vadd.f32 %v1745, %v1761
        %v1930 = vadd.f32 %v1746, %v1762
        %v1931 = vadd.f32 %v1747, %v1763
        %v1932 = vadd.f32 %v1748, %v1764
        %v1933 = vadd.f32 %v1749, %v1765
        %v1934 = vadd.f32 %v1750, %v1766
        %v1935 = vadd.f32 %v1751, %v1767
        %v1936 = vadd.f32 %v1752, %v1768
        %v1937 = vadd.f32 %v1753, %v1769
        %v1938 = vadd.f32 %v1754, %v1770
        %1939 = vmatprep.subr.mxu0 0.0
        %1940 = vmatpush1.msra.mxu0 %v1938
        %1941 = vmatprep.subr.mxu0 0.0
        %1942 = vmatpush1.msra.mxu0 %v1937
        %1943 = vmatprep.subr.mxu0 0.0
        %1944 = vmatpush1.msra.mxu0 %v1936
        %1945 = vmatprep.subr.mxu0 0.0
        %1946 = vmatpush1.msra.mxu0 %v1935
        %1947 = vmatprep.subr.mxu0 0.0
        %1948 = vmatpush1.msra.mxu0 %v1934
        %1949 = vmatprep.subr.mxu0 0.0
        %1950 = vmatpush1.msra.mxu0 %v1933
        %1951 = vmatprep.subr.mxu0 0.0
        %1952 = vmatpush1.msra.mxu0 %v1932
        %1953 = vmatprep.subr.mxu0 0.0
        %1954 = vmatpush1.msra.mxu0 %v1931
        %1955 = vmatprep.subr.mxu0 0.0
        %1956 = vmatpush1.msra.mxu0 %v1930
        %1957 = vmatprep.subr.mxu0 0.0
        %1958 = vmatpush1.msra.mxu0 %v1929
        %1959 = vmatprep.subr.mxu0 0.0
        %1960 = vmatpush1.msra.mxu0 %v1928
        %1961 = vmatprep.subr.mxu0 0.0
        %1962 = vmatpush1.msra.mxu0 %v1927
        %1963 = vmatprep.subr.mxu0 0.0
        %1964 = vmatpush1.msra.mxu0 %v1926
        %1965 = vmatprep.subr.mxu0 0.0
        %1966 = vmatpush1.msra.mxu0 %v1925
        %1967 = vmatprep.subr.mxu0 0.0
        %1968 = vmatpush1.msra.mxu0 %v1924
        %1969 = vmatprep.subr.mxu0 0.0
        %1970 = vmatpush1.msra.mxu0 %v1923
        %1971 = vmatprep.subr.mxu0 0.0
        %1972 = vmatpush2.msra.mxu0 0.0
        %1973 = vmatprep.subr.mxu0 0.0
        %1974 = vmatpush2.msra.mxu0 0.0
        %1975 = vmatprep.subr.mxu0 0.0
        %1976 = vmatpush2.msra.mxu0 0.0
        %1977 = vmatprep.subr.mxu0 0.0
        %1978 = vmatpush2.msra.mxu0 0.0
        %1979 = vmatprep.subr.mxu0 0.0
        %1980 = vmatpush2.msra.mxu0 0.0
        %1981 = vmatprep.subr.mxu0 0.0
        %1982 = vmatpush2.msra.mxu0 0.0
        %1983 = vmatprep.subr.mxu0 0.0
        %1984 = vmatpush2.msra.mxu0 0.0
        %1985 = vmatprep.subr.mxu0 0.0
        %1986 = vmatpush2.msra.mxu0 0.0
        %1987 = vmatprep.subr.mxu0 0.0
        %1988 = vmatpush2.msra.mxu0 0.0
        %1989 = vmatprep.subr.mxu0 0.0
        %1990 = vmatpush2.msra.mxu0 0.0
        %1991 = vmatprep.subr.mxu0 0.0
        %1992 = vmatpush2.msra.mxu0 0.0
        %1993 = vmatprep.subr.mxu0 0.0
        %1994 = vmatpush2.msra.mxu0 0.0
        %1995 = vmatprep.subr.mxu0 0.0
        %1996 = vmatpush2.msra.mxu0 0.0
        %1997 = vmatprep.subr.mxu0 0.0
        %1998 = vmatpush2.msra.mxu0 0.0
        %1999 = vmatprep.subr.mxu0 0.0
        %2000 = vmatpush2.msra.mxu0 0.0
        %2001 = vmatprep.subr.mxu0 0.0
        %2002 = vmatpush2.msra.mxu0 0.0
        %2003 = vmatprep.mubr.f32.mxu0 0.0
        %2004 = vmatmul.mubr.f32.gmra.mxu0 %v1921
        %v2005 = vpop.f32.mrf.mxu0
        %v2006 = vadd.f32 0.0, %v2005
        %v2007 = vpop.f32.mrf.mxu0
        %2008 = vmatprep.mubr.f32.mxu0 0.0
        %2009 = vmatmul.mubr.f32.gmra.mxu0 %v1922
        %v2010 = vpop.f32.mrf.mxu0
        %v2011 = vadd.f32 0.0, %v2010
        %v2012 = vpop.f32.mrf.mxu0
        %2013 = vdwg.mxu0
        %v2014 = vsub.f32 %v1838, %v1913
        %v2015 = vsub.f32 %v1843, %v1918
        %v2016 = vsub.f32 %v2006, %v1838
        %v2017 = vsub.f32 %v2011, %v1843
        %v2018 = vsub.f32 %v2016, %v1913
        %v2019 = vsub.f32 %v2017, %v1918
        %v2020 = vmul.f32 %v922, %v2014
        %v2021 = vmul.f32 %v923, %v2015
        %v2022 = vmul.f32 %v924, %v2018
        %v2023 = vmul.f32 %v925, %v2019
        %v2024 = vadd.f32 %v2020, %v2022
        %v2025 = vadd.f32 %v2021, %v2023
        %v2026 = vmul.f32 %v922, %v2018
        %v2027 = vmul.f32 %v923, %v2019
        %v2028 = vmul.f32 %v924, %v2014
        %v2029 = vmul.f32 %v925, %v2015
        %v2030 = vsub.f32 %v2026, %v2028
        %v2031 = vsub.f32 %v2027, %v2029
        %v2032 = vld [vmem:[#allocation2] sm:$0xff]
        %v2033 = vld [vmem:[#allocation2 + $0x8] sm:$0xff]
        %v2034 = vld [vmem:[%s16] sm:$0xff]
        %v2035 = vld [vmem:[%s16 + $0x8] sm:$0xff]
        %v2036 = vld [vmem:[%s16 + $0x10] sm:$0xff]
        %v2037 = vld [vmem:[%s16 + $0x18] sm:$0xff]
        %v2038 = vld [vmem:[%s16 + $0x20] sm:$0xff]
        %v2039 = vld [vmem:[%s16 + $0x28] sm:$0xff]
        %v2040 = vld [vmem:[%s16 + $0x30] sm:$0xff]
        %v2041 = vld [vmem:[%s16 + $0x38] sm:$0xff]
        %v2042 = vld [vmem:[%s16 + $0x40] sm:$0xff]
        %v2043 = vld [vmem:[%s16 + $0x48] sm:$0xff]
        %v2044 = vld [vmem:[%s16 + $0x50] sm:$0xff]
        %v2045 = vld [vmem:[%s16 + $0x58] sm:$0xff]
        %v2046 = vld [vmem:[%s16 + $0x60] sm:$0xff]
        %v2047 = vld [vmem:[%s16 + $0x68] sm:$0xff]
        %v2048 = vld [vmem:[%s16 + $0x70] sm:$0xff]
        %v2049 = vld [vmem:[%s16 + $0x78] sm:$0xff]
        %2050 = vmatprep.subr.mxu0 0.0
        %2051 = vmatpush1.msra.mxu0 %v2049
        %2052 = vmatprep.subr.mxu0 0.0
        %2053 = vmatpush1.msra.mxu0 %v2048
        %2054 = vmatprep.subr.mxu0 0.0
        %2055 = vmatpush1.msra.mxu0 %v2047
        %2056 = vmatprep.subr.mxu0 0.0
        %2057 = vmatpush1.msra.mxu0 %v2046
        %2058 = vmatprep.subr.mxu0 0.0
        %2059 = vmatpush1.msra.mxu0 %v2045
        %2060 = vmatprep.subr.mxu0 0.0
        %2061 = vmatpush1.msra.mxu0 %v2044
        %2062 = vmatprep.subr.mxu0 0.0
        %2063 = vmatpush1.msra.mxu0 %v2043
        %2064 = vmatprep.subr.mxu0 0.0
        %2065 = vmatpush1.msra.mxu0 %v2042
        %2066 = vmatprep.subr.mxu0 0.0
        %2067 = vmatpush1.msra.mxu0 %v2041
        %2068 = vmatprep.subr.mxu0 0.0
        %2069 = vmatpush1.msra.mxu0 %v2040
        %2070 = vmatprep.subr.mxu0 0.0
        %2071 = vmatpush1.msra.mxu0 %v2039
        %2072 = vmatprep.subr.mxu0 0.0
        %2073 = vmatpush1.msra.mxu0 %v2038
        %2074 = vmatprep.subr.mxu0 0.0
        %2075 = vmatpush1.msra.mxu0 %v2037
        %2076 = vmatprep.subr.mxu0 0.0
        %2077 = vmatpush1.msra.mxu0 %v2036
        %2078 = vmatprep.subr.mxu0 0.0
        %2079 = vmatpush1.msra.mxu0 %v2035
        %2080 = vmatprep.subr.mxu0 0.0
        %2081 = vmatpush1.msra.mxu0 %v2034
        %2082 = vmatprep.subr.mxu0 0.0
        %2083 = vmatpush2.msra.mxu0 0.0
        %2084 = vmatprep.subr.mxu0 0.0
        %2085 = vmatpush2.msra.mxu0 0.0
        %2086 = vmatprep.subr.mxu0 0.0
        %2087 = vmatpush2.msra.mxu0 0.0
        %2088 = vmatprep.subr.mxu0 0.0
        %2089 = vmatpush2.msra.mxu0 0.0
        %2090 = vmatprep.subr.mxu0 0.0
        %2091 = vmatpush2.msra.mxu0 0.0
        %2092 = vmatprep.subr.mxu0 0.0
        %2093 = vmatpush2.msra.mxu0 0.0
        %2094 = vmatprep.subr.mxu0 0.0
        %2095 = vmatpush2.msra.mxu0 0.0
        %2096 = vmatprep.subr.mxu0 0.0
        %2097 = vmatpush2.msra.mxu0 0.0
        %2098 = vmatprep.subr.mxu0 0.0
        %2099 = vmatpush2.msra.mxu0 0.0
        %2100 = vmatprep.subr.mxu0 0.0
        %2101 = vmatpush2.msra.mxu0 0.0
        %2102 = vmatprep.subr.mxu0 0.0
        %2103 = vmatpush2.msra.mxu0 0.0
        %2104 = vmatprep.subr.mxu0 0.0
        %2105 = vmatpush2.msra.mxu0 0.0
        %2106 = vmatprep.subr.mxu0 0.0
        %2107 = vmatpush2.msra.mxu0 0.0
        %2108 = vmatprep.subr.mxu0 0.0
        %2109 = vmatpush2.msra.mxu0 0.0
        %2110 = vmatprep.subr.mxu0 0.0
        %2111 = vmatpush2.msra.mxu0 0.0
        %2112 = vmatprep.subr.mxu0 0.0
        %2113 = vmatpush2.msra.mxu0 0.0
        %2114 = vmatprep.mubr.f32.mxu0 0.0
        %2115 = vmatmul.mubr.f32.gmra.mxu0 %v2024
        %v2116 = vpop.f32.mrf.mxu0
        %v2117 = vadd.f32 0.0, %v2116
        %v2118 = vpop.f32.mrf.mxu0
        %2119 = vmatprep.mubr.f32.mxu0 0.0
        %2120 = vmatmul.mubr.f32.gmra.mxu0 %v2025
        %v2121 = vpop.f32.mrf.mxu0
        %v2122 = vadd.f32 0.0, %v2121
        %v2123 = vpop.f32.mrf.mxu0
        %2124 = vdwg.mxu0
        %v2125 = vadd.f32 %v2032, %v2117
        %v2126 = vadd.f32 %v2033, %v2122
        %2127 = vst.msk [vmem:[#allocation2] sm:$0xff] %vm759, %v2125
        %2128 = vst.msk [vmem:[#allocation2 + $0x8] sm:$0xff] %vm759, %v2126
        %v2129 = vld [vmem:[#allocation3] sm:$0xff]
        %v2130 = vld [vmem:[#allocation3 + $0x8] sm:$0xff]
        %v2131 = vld [vmem:[%s16] sm:$0xff]
        %v2132 = vld [vmem:[%s16 + $0x8] sm:$0xff]
        %v2133 = vld [vmem:[%s16 + $0x10] sm:$0xff]
        %v2134 = vld [vmem:[%s16 + $0x18] sm:$0xff]
        %v2135 = vld [vmem:[%s16 + $0x20] sm:$0xff]
        %v2136 = vld [vmem:[%s16 + $0x28] sm:$0xff]
        %v2137 = vld [vmem:[%s16 + $0x30] sm:$0xff]
        %v2138 = vld [vmem:[%s16 + $0x38] sm:$0xff]
        %v2139 = vld [vmem:[%s16 + $0x40] sm:$0xff]
        %v2140 = vld [vmem:[%s16 + $0x48] sm:$0xff]
        %v2141 = vld [vmem:[%s16 + $0x50] sm:$0xff]
        %v2142 = vld [vmem:[%s16 + $0x58] sm:$0xff]
        %v2143 = vld [vmem:[%s16 + $0x60] sm:$0xff]
        %v2144 = vld [vmem:[%s16 + $0x68] sm:$0xff]
        %v2145 = vld [vmem:[%s16 + $0x70] sm:$0xff]
        %v2146 = vld [vmem:[%s16 + $0x78] sm:$0xff]
        %2147 = vmatprep.subr.mxu0 0.0
        %2148 = vmatpush1.msra.mxu0 %v2146
        %2149 = vmatprep.subr.mxu0 0.0
        %2150 = vmatpush1.msra.mxu0 %v2145
        %2151 = vmatprep.subr.mxu0 0.0
        %2152 = vmatpush1.msra.mxu0 %v2144
        %2153 = vmatprep.subr.mxu0 0.0
        %2154 = vmatpush1.msra.mxu0 %v2143
        %2155 = vmatprep.subr.mxu0 0.0
        %2156 = vmatpush1.msra.mxu0 %v2142
        %2157 = vmatprep.subr.mxu0 0.0
        %2158 = vmatpush1.msra.mxu0 %v2141
        %2159 = vmatprep.subr.mxu0 0.0
        %2160 = vmatpush1.msra.mxu0 %v2140
        %2161 = vmatprep.subr.mxu0 0.0
        %2162 = vmatpush1.msra.mxu0 %v2139
        %2163 = vmatprep.subr.mxu0 0.0
        %2164 = vmatpush1.msra.mxu0 %v2138
        %2165 = vmatprep.subr.mxu0 0.0
        %2166 = vmatpush1.msra.mxu0 %v2137
        %2167 = vmatprep.subr.mxu0 0.0
        %2168 = vmatpush1.msra.mxu0 %v2136
        %2169 = vmatprep.subr.mxu0 0.0
        %2170 = vmatpush1.msra.mxu0 %v2135
        %2171 = vmatprep.subr.mxu0 0.0
        %2172 = vmatpush1.msra.mxu0 %v2134
        %2173 = vmatprep.subr.mxu0 0.0
        %2174 = vmatpush1.msra.mxu0 %v2133
        %2175 = vmatprep.subr.mxu0 0.0
        %2176 = vmatpush1.msra.mxu0 %v2132
        %2177 = vmatprep.subr.mxu0 0.0
        %2178 = vmatpush1.msra.mxu0 %v2131
        %2179 = vmatprep.subr.mxu0 0.0
        %2180 = vmatpush2.msra.mxu0 0.0
        %2181 = vmatprep.subr.mxu0 0.0
        %2182 = vmatpush2.msra.mxu0 0.0
        %2183 = vmatprep.subr.mxu0 0.0
        %2184 = vmatpush2.msra.mxu0 0.0
        %2185 = vmatprep.subr.mxu0 0.0
        %2186 = vmatpush2.msra.mxu0 0.0
        %2187 = vmatprep.subr.mxu0 0.0
        %2188 = vmatpush2.msra.mxu0 0.0
        %2189 = vmatprep.subr.mxu0 0.0
        %2190 = vmatpush2.msra.mxu0 0.0
        %2191 = vmatprep.subr.mxu0 0.0
        %2192 = vmatpush2.msra.mxu0 0.0
        %2193 = vmatprep.subr.mxu0 0.0
        %2194 = vmatpush2.msra.mxu0 0.0
        %2195 = vmatprep.subr.mxu0 0.0
        %2196 = vmatpush2.msra.mxu0 0.0
        %2197 = vmatprep.subr.mxu0 0.0
        %2198 = vmatpush2.msra.mxu0 0.0
        %2199 = vmatprep.subr.mxu0 0.0
        %2200 = vmatpush2.msra.mxu0 0.0
        %2201 = vmatprep.subr.mxu0 0.0
        %2202 = vmatpush2.msra.mxu0 0.0
        %2203 = vmatprep.subr.mxu0 0.0
        %2204 = vmatpush2.msra.mxu0 0.0
        %2205 = vmatprep.subr.mxu0 0.0
        %2206 = vmatpush2.msra.mxu0 0.0
        %2207 = vmatprep.subr.mxu0 0.0
        %2208 = vmatpush2.msra.mxu0 0.0
        %2209 = vmatprep.subr.mxu0 0.0
        %2210 = vmatpush2.msra.mxu0 0.0
        %2211 = vmatprep.mubr.f32.mxu0 0.0
        %2212 = vmatmul.mubr.f32.gmra.mxu0 %v2030
        %v2213 = vpop.f32.mrf.mxu0
        %v2214 = vadd.f32 0.0, %v2213
        %v2215 = vpop.f32.mrf.mxu0
        %2216 = vmatprep.mubr.f32.mxu0 0.0
        %2217 = vmatmul.mubr.f32.gmra.mxu0 %v2031
        %v2218 = vpop.f32.mrf.mxu0
        %v2219 = vadd.f32 0.0, %v2218
        %v2220 = vpop.f32.mrf.mxu0
        %2221 = vdwg.mxu0
        %v2222 = vadd.f32 %v2129, %v2214
        %v2223 = vadd.f32 %v2130, %v2219
        %2224 = vst.msk [vmem:[#allocation3] sm:$0xff] %vm759, %v2222
        %2225 = vst.msk [vmem:[#allocation3 + $0x8] sm:$0xff] %vm759, %v2223
        %p2226 = scmp.eq.s32.totalorder %s32, 1
        // Predicated region
        $region211: #{_dc_call.1} parent=193 // pred_check
          %p2227 = pneg %p2226
        $region212: #{_dc_call.1} parent=193 // pred_check_branch
          %2229 = sbr.rel (%p2227) target = $region214
        $region213: #{_dc_call.1} parent=193 // pred_region
          %s2230 = sld [smem:[#allocation4]]
          %v2231 = vld [vmem:[#allocation2] sm:$0xff]
          %v2232 = vld [vmem:[#allocation2 + $0x8] sm:$0xff]
          %v2233 = vld [vmem:[%s2] sm:$0xff]
          %v2234 = vld [vmem:[%s2 + $0x8] sm:$0xff]
          %v2235 = vsub.f32 %v2231, %v2233
          %v2236 = vsub.f32 %v2232, %v2234
          %v2237 = vstv %s2230
          %v2238 = vmul.f32 %v2237, %v2235
          %v2239 = vmul.f32 %v2237, %v2236
          %v2240 = vsub.f32 %v753, %v2238
          %v2241 = vsub.f32 %v754, %v2239
          %2242 = vst.msk [vmem:[%s18] sm:$0xff] %vm759, %v2240
          %2243 = vst.msk [vmem:[%s18 + $0x8] sm:$0xff] %vm759, %v2241
          %v2244 = vld [vmem:[#allocation3] sm:$0xff]
          %v2245 = vld [vmem:[#allocation3 + $0x8] sm:$0xff]
          %v2246 = vld [vmem:[%s3] sm:$0xff]
          %v2247 = vld [vmem:[%s3 + $0x8] sm:$0xff]
          %v2248 = vsub.f32 %v2244, %v2246
          %v2249 = vsub.f32 %v2245, %v2247
          %v2250 = vmul.f32 %v2237, %v2248
          %v2251 = vmul.f32 %v2237, %v2249
          %v2252 = vsub.f32 %v755, %v2250
          %v2253 = vsub.f32 %v756, %v2251
          %2254 = vst.msk [vmem:[%s19] sm:$0xff] %vm759, %v2252
          %2255 = vst.msk [vmem:[%s19 + $0x8] sm:$0xff] %vm759, %v2253
        $region214: #{_dc_call.1} parent=193 // pred_fallthru
          _
        // Predicated region
        $region215: #{_dc_call.1} parent=193 // pred_check
          %p2256 = pneg %p438
        $region216: #{_dc_call.1} parent=193 // pred_check_branch
          %2258 = sbr.rel (%p2256) target = $region218
        $region217: #{_dc_call.1} parent=193 // pred_region
          _
        $region218: #{_dc_call.1} parent=193 // pred_fallthru
          _
        // Predicated region
        $region219: #{_dc_call.1} parent=193 // pred_check
          %p2259 = pneg %p459
        $region220: #{_dc_call.1} parent=193 // pred_check_branch
          %2261 = sbr.rel (%p2259) target = $region222
        $region221: #{_dc_call.1} parent=193 // pred_region
          _
        $region222: #{_dc_call.1} parent=193 // pred_fallthru
          _
        // Predicated region
        $region223: #{_dc_call.1} parent=193 // pred_check
          %p2262 = pneg %p438
        $region224: #{_dc_call.1} parent=193 // pred_check_branch
          %2264 = sbr.rel (%p2262) target = $region226
        $region225: #{_dc_call.1} parent=193 // pred_region
          _
        $region226: #{_dc_call.1} parent=193 // pred_fallthru
          _
        // Predicated region
        $region227: #{_dc_call.1} parent=193 // pred_check
          %p2265 = pneg %p459
        $region228: #{_dc_call.1} parent=193 // pred_check_branch
          %2267 = sbr.rel (%p2265) target = $region230
        $region229: #{_dc_call.1} parent=193 // pred_region
          _
        $region230: #{_dc_call.1} parent=193 // pred_fallthru
          _
      $region194: #{_dc_call.1} parent=5 // pred_fallthru
        _
      %p2268 = scmp.le.s32.totalorder 2, %s27
      // Predicated region
      $region231: #{_dc_call.1} parent=5 // pred_check
        %p2269 = pneg %p2268
      $region232: #{_dc_call.1} parent=5 // pred_check_branch
        %2271 = sbr.rel (%p2269) target = $region234
      $region233: #{_dc_call.1} parent=5 // pred_region
        %s2272 = ssub.s32 %s27, 2
      $region234: #{_dc_call.1} parent=5 // pred_fallthru
        _
    $region6: #{_dc_call.1} parent=1 // loop_footer
      %s31 = sadd.s32 1, %s27
    $region7: #{_dc_call.1} parent=1 // loop_footer_branch
      %26 = sbr.rel target = $region3
    $region8: #{_dc_call.1} parent=1 // loop_exit
      _

</llo_original>
